<compile_context>
chip_gen: v7x
topology: tpu7x:2x2x1
jax: 0.10.0
libtpu: 0.0.40
codegen_flags: <defaults>
</compile_context>

<pallas_src>
import jax
import jax.numpy as jnp
from jax.experimental import pallas as pl
from jax.experimental.pallas import tpu as pltpu

_LANES = 128
_VMEM_LIMIT_CACHE = None


def _vmem_limit_bytes():
    """Per-generation VMEM budget: ~3/4 of physical (96 MiB v5e/v6e, 48 MiB v7x)."""
    global _VMEM_LIMIT_CACHE
    if _VMEM_LIMIT_CACHE is None:
        phys = 64 * 1024 * 1024
        try:
            info = pltpu.get_tpu_info()
            phys = int(getattr(info, "vmem_capacity_bytes", phys))
        except Exception:
            pass
        _VMEM_LIMIT_CACHE = min(3 * phys // 4, 100 * 1024 * 1024)
    return _VMEM_LIMIT_CACHE


# ----------------------------------------------------------------------------
# Pallas kernels
# ----------------------------------------------------------------------------
def _stem_kernel(x_ref, w_ref, shift_ref, o_ref):
    """One fused LR+HR 3x3/s2 conv (im2col matmul) -> +BN-shift -> SiLU.

    The weight already carries the folded BN scales and is block-diagonal:
    rows 0:3 of every tap feed lanes 0:48 (LR), rows 3:6 feed lanes 48:96 (HR),
    lanes 96:128 are zero padding (lane-dense 128-wide store).
    """
    acc = jnp.dot(x_ref[...], w_ref[...], preferred_element_type=jnp.float32)
    y = acc + shift_ref[...]          # f32 epilogue (v5e has no bf16 VPU/EUP)
    y = y * jax.nn.sigmoid(y)         # SiLU
    o_ref[...] = y.astype(o_ref.dtype)


# ----------------------------------------------------------------------------
# Kernel wrappers
# ----------------------------------------------------------------------------
def _pick_tm(m):
    # Prefer >= 2 grid steps (shards across v7x's 2 TensorCores) with tiles as
    # large as possible (per-step overhead amortization on single-TC v5e/v6e).
    for tm in (4096, 2048, 1024, 512, 256, 128, 64, 32, 16, 8):
        if m >= 2 * tm:
            return tm
    return 8


def _pick_thw(hw):
    # Spatial chunk for the blocks+head kernel.  Prefer a sublane-aligned
    # divisor of HW (no masked tail); otherwise a masked partial last chunk.
    cap = 512
    for t in range(min(cap, hw), 7, -1):
        if t % 8 == 0 and hw % t == 0:
            return t
    if hw <= cap:
        return max(8, ((hw + 7) // 8) * 8)
    return cap


def fused_stem(cols, w, shift):
    m, k = cols.shape
    c = w.shape[1]
    tm = _pick_tm(m)
    return pl.pallas_call(
        _stem_kernel,
        out_shape=jax.ShapeDtypeStruct((m, c), jnp.bfloat16),
        grid_spec=pltpu.PrefetchScalarGridSpec(
            num_scalar_prefetch=0,
            grid=(pl.cdiv(m, tm),),
            in_specs=[
                pl.BlockSpec((tm, k), lambda i: (i, 0)),
                pl.BlockSpec((k, c), lambda i: (0, 0)),   # grid-invariant weights
                pl.BlockSpec((1, c), lambda i: (0, 0)),
            ],
            out_specs=pl.BlockSpec((tm, c), lambda i: (i, 0)),
        ),
        compiler_params=pltpu.CompilerParams(
            dimension_semantics=("parallel",),
            vmem_limit_bytes=_vmem_limit_bytes(),
        ),
    )(cols, w, shift)


def fused_blocks_head(x_nlc, w1, s1, w2, b2):
    """Per batch image: 1x1 conv 96->448 (+BN+SiLU), spatial mean over HW tiles
    accumulated in VMEM scratch, then the folded TopConv/TopBN/Linear head as a
    f32 lane reduction."""
    n, hw, cp = x_nlc.shape
    c_mid = w1.shape[1]
    t_hw = _pick_thw(hw)
    n_chunks = pl.cdiv(hw, t_hw)
    needs_mask = (hw % t_hw) != 0

    def kernel(x_ref, w1_ref, s1_ref, w2_ref, b2_ref, o_ref, acc_ref):
        c = pl.program_id(1)

        @pl.when(c == 0)
        def _():
            acc_ref[...] = jnp.zeros_like(acc_ref)

        x = x_ref[0]                                            # (t_hw, 128) bf16
        h = jnp.dot(x, w1_ref[...],
                    preferred_element_type=jnp.float32) + s1_ref[...]
        a = h * jax.nn.sigmoid(h)                               # SiLU, f32
        if needs_mask:
            row = c * t_hw + jax.lax.broadcasted_iota(jnp.int32, (t_hw, 1), 0)
            a = jnp.where(row < hw, a, 0.0)                     # drop padded rows
        acc_ref[...] += jnp.sum(a, axis=0, keepdims=True)       # pooled running sum

        @pl.when(c == n_chunks - 1)
        def _():
            pooled = acc_ref[...] * (1.0 / float(hw))            # (1, 448) mean
            y = jnp.sum(pooled * w2_ref[...], axis=-1, keepdims=True)  # (1, 1) f32
            y = y + b2_ref[0, 0]
            o_ref[0] = jnp.broadcast_to(y, (1, _LANES)).astype(o_ref.dtype)

    out = pl.pallas_call(
        kernel,
        out_shape=jax.ShapeDtypeStruct((n, 1, _LANES), jnp.float32),
        grid_spec=pltpu.PrefetchScalarGridSpec(
            num_scalar_prefetch=0,
            grid=(n, n_chunks),
            in_specs=[
                pl.BlockSpec((1, t_hw, cp), lambda b, c: (b, c, 0)),
                pl.BlockSpec((cp, c_mid), lambda b, c: (0, 0)),
                pl.BlockSpec((1, c_mid), lambda b, c: (0, 0)),
                pl.BlockSpec((1, c_mid), lambda b, c: (0, 0)),
                pl.BlockSpec(memory_space=pltpu.MemorySpace.SMEM),
            ],
            out_specs=pl.BlockSpec((1, 1, _LANES), lambda b, c: (b, 0, 0)),
            scratch_shapes=[pltpu.VMEM((1, c_mid), jnp.float32)],
        ),
        compiler_params=pltpu.CompilerParams(
            dimension_semantics=("parallel", "arbitrary"),
            vmem_limit_bytes=_vmem_limit_bytes(),
        ),
    )(x_nlc, w1, s1, w2, b2)
    return out[:, 0, 0:1]          # (N, 1)


# ----------------------------------------------------------------------------
# Glue: im2col, BN folding, trace-time weight preparation
# ----------------------------------------------------------------------------
def im2col(x_nhwc, k, stride, pad):
    # TODO(synk): fold the tap gathering into the stem kernel (banded input
    # BlockSpecs with a halo) to avoid the k^2/stride^2 HBM expansion entirely.
    xp = jnp.pad(x_nhwc, ((0, 0), (pad, pad), (pad, pad), (0, 0)))
    n, hp, wp, c = xp.shape
    ho = (hp - k) // stride + 1
    wo = (wp - k) // stride + 1
    taps = []
    for dy in range(k):
        for dx in range(k):
            taps.append(xp[:, dy:dy + stride * ho:stride, dx:dx + stride * wo:stride, :])
    cols = jnp.concatenate(taps, axis=-1)                 # (N, Ho, Wo, k*k*C)
    return cols.reshape(n * ho * wo, k * k * c), (n, ho, wo)


def fold_bn(gamma, beta, mean, var, conv_bias=None, eps=1e-5):
    scale = gamma / jnp.sqrt(var + eps)
    shift = beta - mean * scale
    if conv_bias is not None:
        shift = shift + scale * conv_bias                 # fold conv bias into shift
    return scale, shift


def prepare_stem_weights(params):
    """Fold BN into the conv weights and pack LR+HR into ONE (54, 128) matrix
    matching the channel-concatenated im2col layout (per tap: 3 LR ch, 3 HR ch)."""
    w_lr, b_lr, bn_lr = params["base"]
    w_hr, b_hr, bn_hr = params["base_hr"]
    s_lr, sh_lr = fold_bn(*bn_lr, conv_bias=b_lr)
    s_hr, sh_hr = fold_bn(*bn_hr, conv_bias=b_hr)

    # (cout, cin, kh, kw) -> (kh, kw, cin, cout), BN scale folded into columns.
    w_lr_t = jnp.transpose(w_lr, (2, 3, 1, 0)) * s_lr      # (3, 3, 3, 48)
    w_hr_t = jnp.transpose(w_hr, (2, 3, 1, 0)) * s_hr      # (3, 3, 3, 48)

    w = jnp.zeros((3, 3, 6, _LANES), jnp.float32)
    w = w.at[:, :, 0:3, 0:48].set(w_lr_t)                  # LR channels -> lanes 0:48
    w = w.at[:, :, 3:6, 48:96].set(w_hr_t)                 # HR channels -> lanes 48:96
    w = w.reshape(3 * 3 * 6, _LANES)                       # (54, 128)

    shift = jnp.zeros((1, _LANES), jnp.float32)
    shift = shift.at[0, 0:48].set(sh_lr).at[0, 48:96].set(sh_hr)
    # Lanes 96:128: zero weight + zero shift -> SiLU(0) = 0 downstream.
    return w.astype(jnp.bfloat16), shift


def prepare_blocks_head_weights(params):
    """Fold BN into the 96->448 conv; collapse TopConv+TopBN+AvgPool+Linear."""
    w_p, b_p, bn_p = params["blocks_proj"]                 # (448, 96, 1, 1)
    s_p, sh_p = fold_bn(*bn_p, conv_bias=b_p)
    w1 = jnp.transpose(w_p, (2, 3, 1, 0)).reshape(96, 448) * s_p[None, :]
    w1_pad = jnp.zeros((_LANES, 448), jnp.float32).at[0:96, :].set(w1)
    s1 = sh_p[None, :].astype(jnp.float32)                 # (1, 448)

    # TopConv(448->1792) + TopBN + AvgPool + Linear(1792->1) collapse (valid:
    # no nonlinearity between TopBN and the pool in the reference forward):
    #   out = pooled_448 @ (W_top*scale) @ head_w + shift_top @ head_w + head_b
    w_t, b_t, bn_t = params["top"]                         # (1792, 448, 1, 1)
    s_t, sh_t = fold_bn(*bn_t, conv_bias=b_t)
    w_top = jnp.transpose(w_t, (2, 3, 1, 0)).reshape(448, 1792) * s_t[None, :]
    head_w, head_b = params["head_w"], params["head_b"]    # (1792, 1), (1, 1)
    w_eff = w_top @ head_w                                 # (448, 1)
    b_eff = sh_t[None, :] @ head_w + head_b                # (1, 1)

    w2 = w_eff.T.astype(jnp.float32)                       # (1, 448) f32 head vector
    b2 = b_eff.astype(jnp.float32)                         # (1, 1)   SMEM scalar
    return w1_pad.astype(jnp.bfloat16), s1, w2, b2


# ----------------------------------------------------------------------------
# Deterministic parameter initialization (shapes from EffNetb4Stochastic.__init__)
# ----------------------------------------------------------------------------
def init_params(key):
    ks = jax.random.split(key, 10)

    def conv(k, cout, cin, ksz):
        kw, kb = jax.random.split(k)
        w = 0.1 * jax.random.normal(kw, (cout, cin, ksz, ksz), jnp.float32)
        b = 0.05 * jax.random.normal(kb, (cout,), jnp.float32)
        return w, b

    def bn(k, c):
        k1, k2, k3, k4 = jax.random.split(k, 4)
        gamma = 1.0 + 0.1 * jax.random.normal(k1, (c,), jnp.float32)
        beta = 0.1 * jax.random.normal(k2, (c,), jnp.float32)
        mean = 0.1 * jax.random.normal(k3, (c,), jnp.float32)
        var = 0.5 + jnp.abs(jax.random.normal(k4, (c,), jnp.float32))
        return (gamma, beta, mean, var)

    base_w, base_b = conv(ks[0], 48, 3, 3)       # base_conv: 3 -> 48, k3, s2
    base_bn = bn(ks[1], 48)                      # base_bn
    hr_w, hr_b = conv(ks[2], 48, 3, 3)           # base_conv_hr (StochasticConv4 stand-in)
    hr_bn = bn(ks[3], 48)                        # base_bn_hr
    proj_w, proj_b = conv(ks[4], 448, 96, 1)     # stand-in for InvertedResBlocks 96 -> 448
    proj_bn = bn(ks[5], 448)
    top_w, top_b = conv(ks[6], 1792, 448, 1)     # TopConv: 448 -> 1792, 1x1
    top_bn = bn(ks[7], 1792)                     # TopBN
    head_w = 0.05 * jax.random.normal(ks[8], (1792, 1), jnp.float32)   # Top: Linear(1792, 1)
    head_b = 0.05 * jax.random.normal(ks[9], (1, 1), jnp.float32)

    return dict(
        base=(base_w, base_b, base_bn),
        base_hr=(hr_w, hr_b, hr_bn),
        blocks_proj=(proj_w, proj_b, proj_bn),
        top=(top_w, top_b, top_bn),
        head_w=head_w,
        head_b=head_b,
    )


# ----------------------------------------------------------------------------
# Forward pass (mirrors EffNetb4Stochastic.forward, inference mode)
# ----------------------------------------------------------------------------
def effnetb4_stochastic_forward(params, input_batch):
    x_lr_nchw, x_hr_nchw = input_batch
    # Cast to bf16 BEFORE transpose / im2col: halves the bytes of the im2col
    # intermediate and removes the separate cast pass.
    x_lr = jnp.transpose(x_lr_nchw.astype(jnp.bfloat16), (0, 2, 3, 1))   # NCHW -> NHWC
    x_hr = jnp.transpose(x_hr_nchw.astype(jnp.bfloat16), (0, 2, 3, 1))

    # x    = SiLU(base_bn(base_conv(input_batch[0])))
    # x_hr = SiLU(base_bn_hr(base_conv_hr(input_batch[1])))
    # torch.cat((x, x_hr), dim=1)  -> lanes 0:48 / 48:96 of one 128-lane map.
    # TODO(synk): StochasticConv4 is not defined in the provided source; modeled as a
    # standard 3x3 stride-2 conv producing a spatially-matched 48-channel map.
    x_cat = jnp.concatenate([x_lr, x_hr], axis=-1)           # (N, H, W, 6) bf16
    cols, (n, ho, wo) = im2col(x_cat, k=3, stride=2, pad=1)  # (N*Ho*Wo, 54) bf16
    w_stem, sh_stem = prepare_stem_weights(params)
    stem = fused_stem(cols, w_stem, sh_stem)                 # (M, 128) bf16 (96 real ch)
    stem = stem.reshape(n, ho * wo, _LANES)

    # TODO(synk): GetArchitectureBlockList('b4_96') / build_module_list (inverted-residual
    # stack with DropConnect) is not defined in the provided source; replaced by a single
    # fused 1x1 conv 96->448 + BN + SiLU so TopConv's 448-channel contract is preserved.
    # Then TopBN(TopConv(x)) -> TopAvgPool -> flatten -> TopDrop (identity) -> Top Linear,
    # collapsed at trace time into a (448,) head vector + scalar bias.
    w1, s1, w2, b2 = prepare_blocks_head_weights(params)
    out = fused_blocks_head(stem, w1, s1, w2, b2)            # (N, 1)
    return out


if __name__ == "__main__":
    key = jax.random.PRNGKey(0)
    pkey, k1, k2 = jax.random.split(key, 3)
    params = init_params(pkey)

    # Small shapes: batch=2, 3-channel 16x16 "image" and 16x16 "HR image".
    x_lr = jax.random.normal(k1, (2, 3, 16, 16), jnp.float32)
    x_hr = jax.random.normal(k2, (2, 3, 16, 16), jnp.float32)

    fwd = jax.jit(lambda p, a, b: effnetb4_stochastic_forward(p, (a, b)))
    out = fwd(params, x_lr, x_hr)
    jax.block_until_ready(out)
    assert out.shape == (2, 1) and out.dtype == jnp.float32
    print("KERNEL_OK")
</pallas_src>

<mosaic_0001>
module attributes {stable_mosaic.version = 11 : i64} {
  func.func @_stem_kernel(%arg0: i32, %arg1: memref<64x54xbf16, #tpu.memory_space<vmem>>, %arg2: memref<54x128xbf16, #tpu.memory_space<vmem>>, %arg3: memref<1x128xf32, #tpu.memory_space<vmem>>, %arg4: memref<64x128xbf16, #tpu.memory_space<vmem>>) attributes {dimension_semantics = [#tpu.dimension_semantics<parallel>], iteration_bounds = array<i64: 2>, scalar_prefetch = 0 : i64, scratch_operands = 0 : i64, tpu.core_type = #tpu.core_type<tc>, window_params = [{transform_indices = @transform_0, window_bounds = array<i64: 64, 54>}, {pipeline_mode = #tpu.pipeline_mode<synchronous>, transform_indices = @transform_1, window_bounds = array<i64: 54, 128>}, {pipeline_mode = #tpu.pipeline_mode<synchronous>, transform_indices = @transform_2, window_bounds = array<i64: 1, 128>}, {transform_indices = @transform_3, window_bounds = array<i64: 64, 128>}]} {
    %c0 = arith.constant 0 : index
    %c0_0 = arith.constant 0 : index
    %0 = vector.load %arg1[%c0, %c0_0] : memref<64x54xbf16, #tpu.memory_space<vmem>>, vector<64x54xbf16>
    %c0_1 = arith.constant 0 : index
    %c0_2 = arith.constant 0 : index
    %1 = vector.load %arg2[%c0_1, %c0_2] : memref<54x128xbf16, #tpu.memory_space<vmem>>, vector<54x128xbf16>
    %cst = arith.constant dense<0.000000e+00> : vector<64x128xf32>
    %2 = tpu.matmul %0, %1, %cst {dimension_numbers = #tpu.dot_dimension_numbers<[1], [0], [0], [1], [0, 0, 1, 1], [], []>} : vector<64x54xbf16>, vector<54x128xbf16>, vector<64x128xf32> -> vector<64x128xf32>
    %c0_3 = arith.constant 0 : index
    %c0_4 = arith.constant 0 : index
    %3 = vector.load %arg3[%c0_3, %c0_4] : memref<1x128xf32, #tpu.memory_space<vmem>>, vector<1x128xf32>
    %4 = vector.broadcast %3 : vector<1x128xf32> to vector<64x128xf32>
    %5 = arith.addf %2, %4 : vector<64x128xf32>
    %6 = arith.negf %5 : vector<64x128xf32>
    %7 = math.exp %6 : vector<64x128xf32>
    %cst_5 = arith.constant 1.000000e+00 : f32
    %8 = vector.broadcast %cst_5 : f32 to vector<64x128xf32>
    %9 = arith.addf %8, %7 : vector<64x128xf32>
    %10 = arith.divf %8, %9 : vector<64x128xf32>
    %11 = arith.mulf %5, %10 : vector<64x128xf32>
    %12 = arith.truncf %11 : vector<64x128xf32> to vector<64x128xbf16>
    %c0_6 = arith.constant 0 : index
    %c0_7 = arith.constant 0 : index
    %13 = vector.load %arg4[%c0_6, %c0_7] : memref<64x128xbf16, #tpu.memory_space<vmem>>, vector<64x128xbf16>
    tpu.vector_store %arg4[%c0_6, %c0_7], %12 {strides = array<i32>} : memref<64x128xbf16, #tpu.memory_space<vmem>>, vector<64x128xbf16>,
    return
  }
  func.func @transform_0(%arg0: i32) -> (i32, i32) {
    %c0_i32 = arith.constant 0 : i32
    %c0_i32_0 = arith.constant 0 : i32
    return %arg0, %c0_i32 : i32, i32
  }
  func.func @transform_1(%arg0: i32) -> (i32, i32) {
    %c0_i32 = arith.constant 0 : i32
    %c0_i32_0 = arith.constant 0 : i32
    %c0_i32_1 = arith.constant 0 : i32
    return %c0_i32, %c0_i32_0 : i32, i32
  }
  func.func @transform_2(%arg0: i32) -> (i32, i32) {
    %c0_i32 = arith.constant 0 : i32
    %c0_i32_0 = arith.constant 0 : i32
    %c0_i32_1 = arith.constant 0 : i32
    return %c0_i32, %c0_i32_0 : i32, i32
  }
  func.func @transform_3(%arg0: i32) -> (i32, i32) {
    %c0_i32 = arith.constant 0 : i32
    %c0_i32_0 = arith.constant 0 : i32
    return %arg0, %c0_i32 : i32, i32
  }
}

module attributes {stable_mosaic.version = 11 : i64} {
  func.func @kernel(%arg0: i32, %arg1: i32, %arg2: memref<1x64x128xbf16, #tpu.memory_space<vmem>>, %arg3: memref<128x448xbf16, #tpu.memory_space<vmem>>, %arg4: memref<1x448xf32, #tpu.memory_space<vmem>>, %arg5: memref<1x448xf32, #tpu.memory_space<vmem>>, %arg6: memref<1x1xf32, #tpu.memory_space<smem>>, %arg7: memref<1x1x128xf32, #tpu.memory_space<vmem>>, %arg8: memref<1x448xf32, #tpu.memory_space<vmem>>) attributes {dimension_semantics = [#tpu.dimension_semantics<parallel>, #tpu.dimension_semantics<arbitrary>], iteration_bounds = array<i64: 2, 1>, scalar_prefetch = 0 : i64, scratch_operands = 1 : i64, tpu.core_type = #tpu.core_type<tc>, window_params = [{transform_indices = @transform_0, window_bounds = array<i64: 1, 64, 128>}, {pipeline_mode = #tpu.pipeline_mode<synchronous>, transform_indices = @transform_1, window_bounds = array<i64: 128, 448>}, {pipeline_mode = #tpu.pipeline_mode<synchronous>, transform_indices = @transform_2, window_bounds = array<i64: 1, 448>}, {pipeline_mode = #tpu.pipeline_mode<synchronous>, transform_indices = @transform_3, window_bounds = array<i64: 1, 448>}, {transform_indices = @transform_4, window_bounds = array<i64: 1, 1>}, {transform_indices = @transform_5, window_bounds = array<i64: 1, 1, 128>}]} {
    %c0_i32 = arith.constant 0 : i32
    %0 = arith.cmpi eq, %arg1, %c0_i32 : i32
    %1 = arith.extui %0 : i1 to i32
    %c0_i32_0 = arith.constant 0 : i32
    %2 = arith.cmpi ne, %1, %c0_i32_0 : i32
    scf.if %2 {
      %cst_15 = arith.constant 0.000000e+00 : f32
      %24 = vector.broadcast %cst_15 : f32 to vector<1x448xf32>
      %c0_16 = arith.constant 0 : index
      %c0_17 = arith.constant 0 : index
      %25 = vector.load %arg8[%c0_16, %c0_17] : memref<1x448xf32, #tpu.memory_space<vmem>>, vector<1x448xf32>
      tpu.vector_store %arg8[%c0_16, %c0_17], %24 {strides = array<i32>} : memref<1x448xf32, #tpu.memory_space<vmem>>, vector<1x448xf32>,
    } else {
    }
    %c0 = arith.constant 0 : index
    %c0_1 = arith.constant 0 : index
    %c0_2 = arith.constant 0 : index
    %3 = vector.load %arg2[%c0, %c0_1, %c0_2] : memref<1x64x128xbf16, #tpu.memory_space<vmem>>, vector<1x64x128xbf16>
    %4 = vector.shape_cast %3 : vector<1x64x128xbf16> to vector<64x128xbf16>
    %c0_3 = arith.constant 0 : index
    %c0_4 = arith.constant 0 : index
    %5 = vector.load %arg3[%c0_3, %c0_4] : memref<128x448xbf16, #tpu.memory_space<vmem>>, vector<128x448xbf16>
    %cst = arith.constant dense<0.000000e+00> : vector<64x448xf32>
    %6 = tpu.matmul %4, %5, %cst {dimension_numbers = #tpu.dot_dimension_numbers<[1], [0], [0], [1], [0, 0, 1, 1], [], []>} : vector<64x128xbf16>, vector<128x448xbf16>, vector<64x448xf32> -> vector<64x448xf32>
    %c0_5 = arith.constant 0 : index
    %c0_6 = arith.constant 0 : index
    %7 = vector.load %arg4[%c0_5, %c0_6] : memref<1x448xf32, #tpu.memory_space<vmem>>, vector<1x448xf32>
    %8 = vector.broadcast %7 : vector<1x448xf32> to vector<64x448xf32>
    %9 = arith.addf %6, %8 : vector<64x448xf32>
    %10 = arith.negf %9 : vector<64x448xf32>
    %11 = math.exp %10 : vector<64x448xf32>
    %cst_7 = arith.constant 1.000000e+00 : f32
    %12 = vector.broadcast %cst_7 : f32 to vector<64x448xf32>
    %13 = arith.addf %12, %11 : vector<64x448xf32>
    %14 = arith.divf %12, %13 : vector<64x448xf32>
    %15 = arith.mulf %9, %14 : vector<64x448xf32>
    %c0_8 = arith.constant 0 : index
    %c0_9 = arith.constant 0 : index
    %16 = vector.load %arg8[%c0_8, %c0_9] : memref<1x448xf32, #tpu.memory_space<vmem>>, vector<1x448xf32>
    %cst_10 = arith.constant dense<0.000000e+00> : vector<448xf32>
    %17 = vector.multi_reduction <add>, %15, %cst_10 [0] : vector<64x448xf32> to vector<448xf32>
    %18 = vector.shape_cast %17 : vector<448xf32> to vector<1x448xf32>
    %19 = arith.addf %16, %18 : vector<1x448xf32>
    %c0_11 = arith.constant 0 : index
    %c0_12 = arith.constant 0 : index
    %20 = vector.load %arg8[%c0_11, %c0_12] : memref<1x448xf32, #tpu.memory_space<vmem>>, vector<1x448xf32>
    tpu.vector_store %arg8[%c0_11, %c0_12], %19 {strides = array<i32>} : memref<1x448xf32, #tpu.memory_space<vmem>>, vector<1x448xf32>,
    %c0_i32_13 = arith.constant 0 : i32
    %21 = arith.cmpi eq, %arg1, %c0_i32_13 : i32
    %22 = arith.extui %21 : i1 to i32
    %c0_i32_14 = arith.constant 0 : i32
    %23 = arith.cmpi ne, %22, %c0_i32_14 : i32
    scf.if %23 {
      %c0_15 = arith.constant 0 : index
      %c0_16 = arith.constant 0 : index
      %24 = vector.load %arg8[%c0_15, %c0_16] : memref<1x448xf32, #tpu.memory_space<vmem>>, vector<1x448xf32>
      %cst_17 = arith.constant 1.562500e-02 : f32
      %25 = vector.broadcast %cst_17 : f32 to vector<1x448xf32>
      %26 = arith.mulf %24, %25 : vector<1x448xf32>
      %c0_18 = arith.constant 0 : index
      %c0_19 = arith.constant 0 : index
      %27 = vector.load %arg5[%c0_18, %c0_19] : memref<1x448xf32, #tpu.memory_space<vmem>>, vector<1x448xf32>
      %28 = arith.mulf %26, %27 : vector<1x448xf32>
      %cst_20 = arith.constant dense<0.000000e+00> : vector<1xf32>
      %29 = vector.multi_reduction <add>, %28, %cst_20 [1] : vector<1x448xf32> to vector<1xf32>
      %30 = vector.shape_cast %29 : vector<1xf32> to vector<1x1xf32>
      %c0_21 = arith.constant 0 : index
      %c0_22 = arith.constant 0 : index
      %31 = memref.load %arg6[%c0_21, %c0_22] : memref<1x1xf32, #tpu.memory_space<smem>>
      %32 = vector.broadcast %31 : f32 to vector<1x1xf32>
      %33 = arith.addf %30, %32 : vector<1x1xf32>
      %34 = vector.shape_cast %33 : vector<1x1xf32> to vector<1x1xf32>
      %35 = vector.broadcast %34 : vector<1x1xf32> to vector<1x128xf32>
      %c0_23 = arith.constant 0 : index
      %c0_24 = arith.constant 0 : index
      %c0_25 = arith.constant 0 : index
      %36 = vector.load %arg7[%c0_23, %c0_24, %c0_25] : memref<1x1x128xf32, #tpu.memory_space<vmem>>, vector<1x1x128xf32>
      %37 = vector.shape_cast %36 : vector<1x1x128xf32> to vector<1x128xf32>
      %38 = vector.shape_cast %35 : vector<1x128xf32> to vector<1x1x128xf32>
      tpu.vector_store %arg7[%c0_23, %c0_24, %c0_25], %38 {strides = array<i32>} : memref<1x1x128xf32, #tpu.memory_space<vmem>>, vector<1x1x128xf32>,
    } else {
    }
    return
  }
  func.func @transform_0(%arg0: i32, %arg1: i32) -> (i32, i32, i32) {
    %c0_i32 = arith.constant 0 : i32
    %c0_i32_0 = arith.constant 0 : i32
    return %arg0, %arg1, %c0_i32 : i32, i32, i32
  }
  func.func @transform_1(%arg0: i32, %arg1: i32) -> (i32, i32) {
    %c0_i32 = arith.constant 0 : i32
    %c0_i32_0 = arith.constant 0 : i32
    %c0_i32_1 = arith.constant 0 : i32
    return %c0_i32, %c0_i32_0 : i32, i32
  }
  func.func @transform_2(%arg0: i32, %arg1: i32) -> (i32, i32) {
    %c0_i32 = arith.constant 0 : i32
    %c0_i32_0 = arith.constant 0 : i32
    %c0_i32_1 = arith.constant 0 : i32
    return %c0_i32, %c0_i32_0 : i32, i32
  }
  func.func @transform_3(%arg0: i32, %arg1: i32) -> (i32, i32) {
    %c0_i32 = arith.constant 0 : i32
    %c0_i32_0 = arith.constant 0 : i32
    %c0_i32_1 = arith.constant 0 : i32
    return %c0_i32, %c0_i32_0 : i32, i32
  }
  func.func @transform_4(%arg0: i32, %arg1: i32) -> (i32, i32) {
    %c0_i32 = arith.constant 0 : i32
    %c0_i32_0 = arith.constant 0 : i32
    %c0_i32_1 = arith.constant 0 : i32
    return %c0_i32, %c0_i32_0 : i32, i32
  }
  func.func @transform_5(%arg0: i32, %arg1: i32) -> (i32, i32, i32) {
    %c0_i32 = arith.constant 0 : i32
    %c0_i32_0 = arith.constant 0 : i32
    %c0_i32_1 = arith.constant 0 : i32
    return %arg0, %c0_i32, %c0_i32_0 : i32, i32, i32
  }
}

</mosaic_0001>

<llo_original>
// kernel: _lambda_.2
$region0: #{_lambda_.2}
  #allocation0 [shape = 'u32[]', space=smem, size = 0x4, offset = 0x4, fixed_abs, tag = 'smem constant byte address 0x4 - core index']
  #allocation1 [shape = 'u32[144,128]{1,0:T(1,128)}', space=vmem, size = 0x12000, scoped, tag = 'internal scratch']
  %s0 = inlined_call_operand.vmem [shape: bf16[128,54], index: 0, kind: input, shape index: {}]
  %s1 = inlined_call_operand.vmem [shape: bf16[54,128], index: 1, kind: input, shape index: {}]
  %s2 = inlined_call_operand.vmem [shape: f32[1,128], index: 2, kind: input, shape index: {}]
  %s3 = inlined_call_operand.vmem [shape: bf16[128,128], index: 3, kind: output, shape index: {}]
  %s4 = sld [smem:[#allocation0]]
  $region45: #{_lambda_.2} parent=0
    _
  %s6 = ssub.s32 1, %s4
  %s7 = scalar_select 0, %s6, %s4
  loop: start=0, step=1, limit=4
  $region2: #{_lambda_.2} parent=0 // loop_pre_header
    _
  $region3: #{_lambda_.2} parent=0 // loop_header
    %s9 = sphi 0, %s13
    %p10 = scmp.ge.s32.totalorder %s9, 4
    %s19 = sphi 0, %s21
    %s22 = sphi 0, %s19
    %s23 = sphi 0, %s22
    %s39 = sphi 0, %s23
    %s43 = sphi 0, %s43
    %s45 = sphi 0, %s43
    %s46 = sphi 0, %s45
    %s60 = sphi 0, %s46
    %s64 = sphi 0, %s64
    %s66 = sphi 0, %s64
    %s67 = sphi 0, %s66
    %s81 = sphi 0, %s67
    %s87 = sphi 0, %s89
    %s90 = sphi 0, %s87
    %s91 = sphi 0, %s90
    %s107 = sphi 0, %s91
  $region4: #{_lambda_.2} parent=0 // loop_header_branch
    %12 = sbr.rel (%p10) target = $region8
  $region5: #{_lambda_.2} parent=0 // loop_body
    %s14 = ssub.s32 %s9, 1
    %s15 = ssub.s32 %s9, 2
    %s16 = sadd.s32 %s9, 1
    %s17 = ssub.s32 %s9, %s16
    %p18 = scmp.eq.s32.totalorder %s17, 0
    %s20 = sadd.s32 %s19, 1
    %s21 = scalar_select %p18, %s19, %s20
    %p24 = pneg %p18
    %p25 = scmp.eq.s32.totalorder %s9, 1
    %p26 = por %p24, %p25
    %p27 = scmp.ne.s32.totalorder %s19, %s22
    %p28 = scmp.eq.s32.totalorder %s9, 0
    %p29 = por %p27, %p28
    %p30 = scmp.ne.s32.totalorder %s19, %s22
    %p31 = scmp.eq.s32.totalorder %s14, 1
    %p32 = por %p30, %p31
    %p33 = scmp.ne.s32.totalorder %s22, %s23
    %p34 = scmp.eq.s32.totalorder %s14, 0
    %p35 = por %p33, %p34
    %p36 = scmp.ne.s32.totalorder %s22, %s23
    %p37 = scmp.eq.s32.totalorder %s15, 1
    %p38 = por %p36, %p37
    %p40 = scmp.ne.s32.totalorder %s23, %s39
    %p41 = scmp.eq.s32.totalorder %s15, 0
    %p42 = por %p40, %p41
    %s44 = sadd.s32 %s43, 1
    %p47 = scmp.eq.s32.totalorder %s9, 1
    %p48 = scmp.ne.s32.totalorder %s43, %s45
    %p49 = scmp.eq.s32.totalorder %s9, 0
    %p50 = por %p48, %p49
    %p51 = scmp.ne.s32.totalorder %s43, %s45
    %p52 = scmp.eq.s32.totalorder %s14, 1
    %p53 = por %p51, %p52
    %p54 = scmp.ne.s32.totalorder %s45, %s46
    %p55 = scmp.eq.s32.totalorder %s14, 0
    %p56 = por %p54, %p55
    %p57 = scmp.ne.s32.totalorder %s45, %s46
    %p58 = scmp.eq.s32.totalorder %s15, 1
    %p59 = por %p57, %p58
    %p61 = scmp.ne.s32.totalorder %s46, %s60
    %p62 = scmp.eq.s32.totalorder %s15, 0
    %p63 = por %p61, %p62
    %s65 = sadd.s32 %s64, 1
    %p68 = scmp.eq.s32.totalorder %s9, 1
    %p69 = scmp.ne.s32.totalorder %s64, %s66
    %p70 = scmp.eq.s32.totalorder %s9, 0
    %p71 = por %p69, %p70
    %p72 = scmp.ne.s32.totalorder %s64, %s66
    %p73 = scmp.eq.s32.totalorder %s14, 1
    %p74 = por %p72, %p73
    %p75 = scmp.ne.s32.totalorder %s66, %s67
    %p76 = scmp.eq.s32.totalorder %s14, 0
    %p77 = por %p75, %p76
    %p78 = scmp.ne.s32.totalorder %s66, %s67
    %p79 = scmp.eq.s32.totalorder %s15, 1
    %p80 = por %p78, %p79
    %p82 = scmp.ne.s32.totalorder %s67, %s81
    %p83 = scmp.eq.s32.totalorder %s15, 0
    %p84 = por %p82, %p83
    %s85 = ssub.s32 %s9, %s16
    %p86 = scmp.eq.s32.totalorder %s85, 0
    %s88 = sadd.s32 %s87, 1
    %s89 = scalar_select %p86, %s87, %s88
    %p92 = pneg %p86
    %p93 = scmp.eq.s32.totalorder %s9, 1
    %p94 = por %p92, %p93
    %p95 = scmp.ne.s32.totalorder %s87, %s90
    %p96 = scmp.eq.s32.totalorder %s9, 0
    %p97 = por %p95, %p96
    %p98 = scmp.ne.s32.totalorder %s87, %s90
    %p99 = scmp.eq.s32.totalorder %s14, 1
    %p100 = por %p98, %p99
    %p101 = scmp.ne.s32.totalorder %s90, %s91
    %p102 = scmp.eq.s32.totalorder %s14, 0
    %p103 = por %p101, %p102
    %p104 = scmp.ne.s32.totalorder %s90, %s91
    %p105 = scmp.eq.s32.totalorder %s15, 1
    %p106 = por %p104, %p105
    %p108 = scmp.ne.s32.totalorder %s91, %s107
    %p109 = scmp.eq.s32.totalorder %s15, 0
    %p110 = por %p108, %p109
    %p111 = scmp.le.s32.totalorder 1, %s9
    %p112 = scmp.lt.s32.totalorder %s9, 3
    %p113 = pnand %p111, %p112
    %p114 = pneg %p113
    // Predicated region
    $region9: #{_lambda_.2} parent=5 // pred_check
      _
    $region10: #{_lambda_.2} parent=5 // pred_check_branch
      %116 = sbr.rel (%p113) target = $region12
    $region11: #{_lambda_.2} parent=5 // pred_region
      %s117 = ssub.s32 %s9, 1
      // Predicated region
      $region13: #{_lambda_.2} parent=11 // pred_check
        %p118 = pneg %p56
      $region14: #{_lambda_.2} parent=11 // pred_check_branch
        %120 = sbr.rel (%p118) target = $region16
      $region15: #{_lambda_.2} parent=11 // pred_region
        _
      $region16: #{_lambda_.2} parent=11 // pred_fallthru
        _
      // Predicated region
      $region17: #{_lambda_.2} parent=11 // pred_check
        %p121 = pneg %p77
      $region18: #{_lambda_.2} parent=11 // pred_check_branch
        %123 = sbr.rel (%p121) target = $region20
      $region19: #{_lambda_.2} parent=11 // pred_region
        _
      $region20: #{_lambda_.2} parent=11 // pred_fallthru
        _
    $region12: #{_lambda_.2} parent=5 // pred_fallthru
      _
    %p124 = scmp.lt.s32.totalorder %s9, 2
    // Predicated region
    $region21: #{_lambda_.2} parent=5 // pred_check
      %p125 = pneg %p124
    $region22: #{_lambda_.2} parent=5 // pred_check_branch
      %127 = sbr.rel (%p125) target = $region24
    $region23: #{_lambda_.2} parent=5 // pred_region
      // Predicated region
      $region25: #{_lambda_.2} parent=23 // pred_check
        %p128 = pneg %p29
      $region26: #{_lambda_.2} parent=23 // pred_check_branch
        %130 = sbr.rel (%p128) target = $region28
      $region27: #{_lambda_.2} parent=23 // pred_region
        %s131 = smul.u32 8, %s9
        %p132 = scmp.lt.s32.totalorder %s131, 15
        %s133 = scalar_select %p132, %s131, 15
        %s134 = smul.addr %s133, 4
        %s135 = scalar_lea.vmem %s0, %s134
        %s136 = smul.u32 8, %s9
      $region28: #{_lambda_.2} parent=23 // pred_fallthru
        _
    $region24: #{_lambda_.2} parent=5 // pred_fallthru
      _
    %p137 = scmp.le.s32.totalorder 1, %s9
    %p138 = scmp.lt.s32.totalorder %s9, 3
    %p139 = pnand %p137, %p138
    %p140 = pneg %p139
    // Predicated region
    $region29: #{_lambda_.2} parent=5 // pred_check
      _
    $region30: #{_lambda_.2} parent=5 // pred_check_branch
      %142 = sbr.rel (%p139) target = $region32
    $region31: #{_lambda_.2} parent=5 // pred_region
      %s143 = ssub.s32 %s9, 1
      %s144 = smul.u32 8, %s14
      %p145 = scmp.lt.s32.totalorder %s144, 15
      %s146 = scalar_select %p145, %s144, 15
      %s147 = smul.addr %s146, 4
      %s148 = scalar_lea.vmem %s0, %s147
      %p149 = pneg %p35
      %p150 = pneg %p32
      %p151 = pneg %p56
      %p152 = pneg %p53
      %p153 = pneg %p77
      %p154 = pneg %p74
      %p155 = pneg %p103
      %p156 = pneg %p100
      %s157 = smul.u32 8, %s14
      %p158 = scmp.lt.s32.totalorder %s157, 15
      %s159 = scalar_select %p158, %s157, 15
      %s160 = smul.addr %s159, 4
      %s161 = scalar_lea.vmem %s3, %s160
      %s162 = smul.u32 8, %s14
      %p163 = scmp.lt.s32.totalorder %s162, 15
      %s164 = scalar_select %p163, %s162, 15
      %s165 = smul.addr %s164, 4
      %s166 = scalar_lea.vmem %s0, %s165
      %s167 = smul.u32 8, %s14
      %s168 = smul.u32 8, %s14
      %p169 = scmp.lt.s32.totalorder %s168, 15
      %s170 = scalar_select %p169, %s168, 15
      %s171 = smul.addr %s170, 4
      %s172 = scalar_lea.vmem %s3, %s171
      %s173 = smul.u32 8, %s14
      %v175 = vld [vmem:[%s166] sm:$0xf]
      %v176 = vld [vmem:[%s166 + $0x4] sm:$0xf]
      %v177 = vld [vmem:[%s166 + $0x8] sm:$0xf]
      %v178 = vld [vmem:[%s166 + $0xc] sm:$0xf]
      %v179 = vld [vmem:[%s166 + $0x10] sm:$0xf]
      %v180 = vld [vmem:[%s166 + $0x14] sm:$0xf]
      %v181 = vld [vmem:[%s166 + $0x18] sm:$0xf]
      %v182 = vld [vmem:[%s166 + $0x1c] sm:$0xf]
      %v183 = vld [vmem:[%s1] sm:$0xf]
      %v184 = vld [vmem:[%s1 + $0x4] sm:$0xf]
      %v185 = vld [vmem:[%s1 + $0x8] sm:$0xf]
      %v186 = vld [vmem:[%s1 + $0xc] sm:$0xf]
      %v187 = vld [vmem:[%s1 + $0x10] sm:$0xf]
      %v188 = vld [vmem:[%s1 + $0x14] sm:$0xf]
      %v189 = vld [vmem:[%s1 + $0x18] sm:$0x7]
      %v190 = vld [vmem:[%s2] sm:$0x1]
      %v192 = vlaneseq
      %v193 = vshrl.u32 %v192, 7
      %v194 = vsub.s32 0, %v193
      %v195 = vrot.slane %v190, %v194
      %v205 = vunpack.c.l.b16 %v175
      %v206 = vunpack.c.l.b16 %v176
      %v207 = vunpack.c.l.b16 %v177
      %v208 = vunpack.c.l.b16 %v178
      %v209 = vunpack.c.l.b16 %v179
      %v210 = vunpack.c.l.b16 %v180
      %v211 = vunpack.c.l.b16 %v181
      %v212 = vunpack.c.l.b16 %v182
      %v213 = vpack.c.b16 %v206, %v205
      %v214 = vpack.c.b16 %v208, %v207
      %v215 = vpack.c.b16 %v210, %v209
      %v216 = vpack.c.b16 %v212, %v211
      %v224 = vunpack.c.l.b16 %v183
      %v225 = vunpack.c.l.b16 %v184
      %v226 = vunpack.c.l.b16 %v185
      %v227 = vunpack.c.l.b16 %v186
      %v228 = vunpack.c.l.b16 %v187
      %v229 = vunpack.c.l.b16 %v188
      %v230 = vunpack.c.l.b16 %v189
      %v231 = vpack.c.b16 %v225, %v224
      %v232 = vpack.c.b16 %v227, %v226
      %v233 = vpack.c.b16 %v229, %v228
      %v234 = vpack.c.b16 %v230, %v230
      %vm238 = vcmask 441344
      %v240 = vsel %vm238, %v213, 0
      %v243 = vsel %vm238, %v214, 0
      %v246 = vsel %vm238, %v215, 0
      %v249 = vsel %vm238, %v216, 0
      %vm251 = vcmask 1042432
      %v253 = vsel %vm251, %v234, 0
      %255 = vmatprep.subr.bf16.mxu0 0
      %256 = vmatpush1.bf16.msra.mxu0 %v231
      %257 = vmatprep.subr.bf16.mxu0 0
      %258 = vmatpush1.bf16.msra.mxu0 %v232
      %259 = vmatprep.subr.bf16.mxu0 0
      %260 = vmatpush1.bf16.msra.mxu0 %v233
      %261 = vmatprep.subr.bf16.mxu0 0
      %262 = vmatpush1.bf16.msra.mxu0 %v253
      %263 = vmatprep.subr.bf16.mxu0 0
      %264 = vmatpush1.bf16.msra.mxu0 0
      %265 = vmatprep.subr.bf16.mxu0 0
      %266 = vmatpush1.bf16.msra.mxu0 0
      %267 = vmatprep.subr.bf16.mxu0 0
      %268 = vmatpush1.bf16.msra.mxu0 0
      %269 = vmatprep.subr.bf16.mxu0 0
      %270 = vmatpush1.bf16.msra.mxu0 0
      %271 = vmatprep.subr.bf16.mxu0 0
      %272 = vmatpush1.bf16.msra.mxu0 0
      %273 = vmatprep.subr.bf16.mxu0 0
      %274 = vmatpush1.bf16.msra.mxu0 0
      %275 = vmatprep.subr.bf16.mxu0 0
      %276 = vmatpush1.bf16.msra.mxu0 0
      %277 = vmatprep.subr.bf16.mxu0 0
      %278 = vmatpush1.bf16.msra.mxu0 0
      %279 = vmatprep.subr.bf16.mxu0 0
      %280 = vmatpush1.bf16.msra.mxu0 0
      %281 = vmatprep.subr.bf16.mxu0 0
      %282 = vmatpush1.bf16.msra.mxu0 0
      %283 = vmatprep.subr.bf16.mxu0 0
      %284 = vmatpush1.bf16.msra.mxu0 0
      %285 = vmatprep.subr.bf16.mxu0 0
      %286 = vmatpush1.bf16.msra.mxu0 0
      %287 = vmatprep.mubr.bf16.mxu0 0
      %288 = vmatmul.mubr.bf16.gmra.mrb[0].mxu0 %v240
      %v289 = vpop.f32.mrb[0].mxu0
      %v290 = vadd.f32 %v195, %v289
      %v291 = vpop.f32.mrb[0].mxu0
      %v292 = vpop.f32.mrb[0].mxu0
      %v293 = vadd.f32 %v195, %v292
      %v294 = vpop.f32.mrb[0].mxu0
      %295 = vmatprep.mubr.bf16.mxu0 0
      %296 = vmatmul.mubr.bf16.gmra.mrb[0].mxu0 %v243
      %v297 = vpop.f32.mrb[0].mxu0
      %v298 = vadd.f32 %v195, %v297
      %v299 = vpop.f32.mrb[0].mxu0
      %v300 = vpop.f32.mrb[0].mxu0
      %v301 = vadd.f32 %v195, %v300
      %v302 = vpop.f32.mrb[0].mxu0
      %303 = vmatprep.mubr.bf16.mxu0 0
      %304 = vmatmul.mubr.bf16.gmra.mrb[0].mxu0 %v246
      %v305 = vpop.f32.mrb[0].mxu0
      %v306 = vadd.f32 %v195, %v305
      %v307 = vpop.f32.mrb[0].mxu0
      %v308 = vpop.f32.mrb[0].mxu0
      %v309 = vadd.f32 %v195, %v308
      %v310 = vpop.f32.mrb[0].mxu0
      %311 = vmatprep.mubr.bf16.mxu0 0
      %312 = vmatmul.mubr.bf16.gmra.mrb[0].mxu0 %v249
      %v313 = vpop.f32.mrb[0].mxu0
      %v314 = vadd.f32 %v195, %v313
      %v315 = vpop.f32.mrb[0].mxu0
      %v316 = vpop.f32.mrb[0].mxu0
      %v317 = vadd.f32 %v195, %v316
      %v318 = vpop.f32.mrb[0].mxu0
      %319 = vdwg.mxu0
      %v320 = vxor.u32 %v290, 2147483648
      %v321 = vxor.u32 %v293, 2147483648
      %v322 = vxor.u32 %v298, 2147483648
      %v323 = vxor.u32 %v301, 2147483648
      %v324 = vxor.u32 %v306, 2147483648
      %v325 = vxor.u32 %v309, 2147483648
      %v326 = vxor.u32 %v314, 2147483648
      %v327 = vxor.u32 %v317, 2147483648
      %v328 = vmul.f32 %v320, 1.442695
      %v329 = vpow.pop %v328
      %v330 = vmul.f32 %v321, 1.442695
      %v331 = vpow.pop %v330
      %v332 = vmul.f32 %v322, 1.442695
      %v333 = vpow.pop %v332
      %v334 = vmul.f32 %v323, 1.442695
      %v335 = vpow.pop %v334
      %v336 = vmul.f32 %v324, 1.442695
      %v337 = vpow.pop %v336
      %v338 = vmul.f32 %v325, 1.442695
      %v339 = vpow.pop %v338
      %v340 = vmul.f32 %v326, 1.442695
      %v341 = vpow.pop %v340
      %v342 = vmul.f32 %v327, 1.442695
      %v343 = vpow.pop %v342
      %v344 = vadd.f32 %v329, 1.0
      %v345 = vadd.f32 %v331, 1.0
      %v346 = vadd.f32 %v333, 1.0
      %v347 = vadd.f32 %v335, 1.0
      %v348 = vadd.f32 %v337, 1.0
      %v349 = vadd.f32 %v339, 1.0
      %v350 = vadd.f32 %v341, 1.0
      %v351 = vadd.f32 %v343, 1.0
      %v352 = vrcp.pop %v344
      %v353 = vmul.f32 1.0, %v352
      %v354 = vrcp.pop %v345
      %v355 = vmul.f32 1.0, %v354
      %v356 = vrcp.pop %v346
      %v357 = vmul.f32 1.0, %v356
      %v358 = vrcp.pop %v347
      %v359 = vmul.f32 1.0, %v358
      %v360 = vrcp.pop %v348
      %v361 = vmul.f32 1.0, %v360
      %v362 = vrcp.pop %v349
      %v363 = vmul.f32 1.0, %v362
      %v364 = vrcp.pop %v350
      %v365 = vmul.f32 1.0, %v364
      %v366 = vrcp.pop %v351
      %v367 = vmul.f32 1.0, %v366
      %v368 = vmul.f32 %v290, %v353
      %v369 = vmul.f32 %v293, %v355
      %v370 = vmul.f32 %v298, %v357
      %v371 = vmul.f32 %v301, %v359
      %v372 = vmul.f32 %v306, %v361
      %v373 = vmul.f32 %v309, %v363
      %v374 = vmul.f32 %v314, %v365
      %v375 = vmul.f32 %v317, %v367
      %v376 = vpack.c.bf16 %v369, %v368
      %v377 = vpack.c.bf16 %v371, %v370
      %v378 = vpack.c.bf16 %v373, %v372
      %v379 = vpack.c.bf16 %v375, %v374
      %v384 = vunpack.c.l.b16 %v376
      %v385 = vunpack.c.h.b16 %v376
      %v386 = vunpack.c.l.b16 %v377
      %v387 = vunpack.c.h.b16 %v377
      %v388 = vunpack.c.l.b16 %v378
      %v389 = vunpack.c.h.b16 %v378
      %v390 = vunpack.c.l.b16 %v379
      %v391 = vunpack.c.h.b16 %v379
      %v392 = vpack.c.b16 %v384, %v384
      %v393 = vpack.c.b16 %v385, %v385
      %v394 = vpack.c.b16 %v386, %v386
      %v395 = vpack.c.b16 %v387, %v387
      %v396 = vpack.c.b16 %v388, %v388
      %v397 = vpack.c.b16 %v389, %v389
      %v398 = vpack.c.b16 %v390, %v390
      %v399 = vpack.c.b16 %v391, %v391
      %408 = vst [vmem:[%s172] sm:$0xf] %v392
      %409 = vst [vmem:[%s172 + $0x4] sm:$0xf] %v393
      %410 = vst [vmem:[%s172 + $0x8] sm:$0xf] %v394
      %411 = vst [vmem:[%s172 + $0xc] sm:$0xf] %v395
      %412 = vst [vmem:[%s172 + $0x10] sm:$0xf] %v396
      %413 = vst [vmem:[%s172 + $0x14] sm:$0xf] %v397
      %414 = vst [vmem:[%s172 + $0x18] sm:$0xf] %v398
      %415 = vst [vmem:[%s172 + $0x1c] sm:$0xf] %v399
      %s416 = smul.u32 8, %s14
      %p417 = scmp.lt.s32.totalorder %s416, 15
      %s418 = scalar_select %p417, %s416, 15
      %s419 = smul.addr %s418, 4
      %s420 = scalar_lea.vmem %s3, %s419
      // Predicated region
      $region33: #{_lambda_.2} parent=31 // pred_check
        %p421 = pneg %p100
      $region34: #{_lambda_.2} parent=31 // pred_check_branch
        %423 = sbr.rel (%p421) target = $region36
      $region35: #{_lambda_.2} parent=31 // pred_region
        %s424 = smul.u32 8, %s14
      $region36: #{_lambda_.2} parent=31 // pred_fallthru
        _
    $region32: #{_lambda_.2} parent=5 // pred_fallthru
      _
    %p425 = scmp.le.s32.totalorder 2, %s9
    // Predicated region
    $region37: #{_lambda_.2} parent=5 // pred_check
      %p426 = pneg %p425
    $region38: #{_lambda_.2} parent=5 // pred_check_branch
      %428 = sbr.rel (%p426) target = $region40
    $region39: #{_lambda_.2} parent=5 // pred_region
      %s429 = ssub.s32 %s9, 2
      // Predicated region
      $region41: #{_lambda_.2} parent=39 // pred_check
        %p430 = pneg %p106
      $region42: #{_lambda_.2} parent=39 // pred_check_branch
        %432 = sbr.rel (%p430) target = $region44
      $region43: #{_lambda_.2} parent=39 // pred_region
        %s433 = smul.u32 8, %s15
        %p434 = scmp.lt.s32.totalorder %s433, 15
        %s435 = scalar_select %p434, %s433, 15
        %s436 = smul.addr %s435, 4
        %s437 = scalar_lea.vmem %s3, %s436
      $region44: #{_lambda_.2} parent=39 // pred_fallthru
        _
    $region40: #{_lambda_.2} parent=5 // pred_fallthru
      _
  $region6: #{_lambda_.2} parent=0 // loop_footer
    %s13 = sadd.s32 1, %s9
  $region7: #{_lambda_.2} parent=0 // loop_footer_branch
    %8 = sbr.rel target = $region3
  $region8: #{_lambda_.2} parent=0 // loop_exit
    _

// kernel: _lambda_.3
$region0: #{_lambda_.3}
  #allocation0 [shape = 'u32[]', space=smem, size = 0x4, offset = 0x4, fixed_abs, tag = 'smem constant byte address 0x4 - core index']
  #allocation1 [shape = 'u32[144,128]{1,0:T(1,128)}', space=vmem, size = 0x12000, scoped, tag = 'internal scratch']
  #allocation2 [shape = 'f32[1,448]{1,0:T(1,128)}', space=vmem, size = 0x800, scoped, tag = 'scratch operand']
  #allocation3 [shape = 'f32[1,1]{1,0:T(1,128)S(6)}', space=smem, size = 0x200, scoped, tag = 'scoped memory for _lambda_.3']
  %s0 = inlined_call_operand.vmem [shape: bf16[2,64,128], index: 0, kind: input, shape index: {}]
  %s1 = inlined_call_operand.vmem [shape: bf16[128,448], index: 1, kind: input, shape index: {}]
  %s2 = inlined_call_operand.vmem [shape: f32[1,448], index: 2, kind: input, shape index: {}]
  %s3 = inlined_call_operand.vmem [shape: f32[1,448], index: 3, kind: input, shape index: {}]
  %s4 = inlined_call_operand.<no memory space> [shape: f32[1,1], index: 4, kind: input, shape index: {}]
  %s5 = inlined_call_operand.vmem [shape: f32[2,1,128], index: 5, kind: output, shape index: {}]
  %s6 = sld [smem:[#allocation0]]
  $region61: #{_lambda_.3} parent=0
    _
  %s8 = ssub.s32 1, %s6
  %s9 = scalar_select 0, %s8, %s6
  %10 = sst [smem:[#allocation3]] %s4
  loop: start=0, step=1, limit=4
  $region2: #{_lambda_.3} parent=0 // loop_pre_header
    _
  $region3: #{_lambda_.3} parent=0 // loop_header
    %s12 = sphi 0, %s16
    %p13 = scmp.ge.s32.totalorder %s12, 4
    %s19 = sphi 0, %s31
    %s20 = sphi 0, %s27
    %s21 = sphi 0, %s19
    %s22 = sphi 0, %s20
    %s23 = sphi 0, %s21
    %s24 = sphi 0, %s22
    %s36 = sphi 0, %s38
    %s39 = sphi 0, %s36
    %s40 = sphi 0, %s39
    %s56 = sphi 0, %s40
    %s60 = sphi 0, %s60
    %s62 = sphi 0, %s60
    %s63 = sphi 0, %s62
    %s77 = sphi 0, %s63
    %s81 = sphi 0, %s81
    %s83 = sphi 0, %s81
    %s84 = sphi 0, %s83
    %s98 = sphi 0, %s84
    %s102 = sphi 0, %s102
    %s104 = sphi 0, %s102
    %s105 = sphi 0, %s104
    %s119 = sphi 0, %s105
    %s123 = sphi 0, %s123
    %s125 = sphi 0, %s123
    %s126 = sphi 0, %s125
    %s140 = sphi 0, %s126
    %s146 = sphi 0, %s148
    %s149 = sphi 0, %s146
    %s150 = sphi 0, %s149
    %s166 = sphi 0, %s150
  $region4: #{_lambda_.3} parent=0 // loop_header_branch
    %15 = sbr.rel (%p13) target = $region8
  $region5: #{_lambda_.3} parent=0 // loop_body
    %s17 = ssub.s32 %s12, 1
    %s18 = ssub.s32 %s12, 2
    %s25 = sadd.s32 1, %s20
    %p26 = scmp.ge.s32.totalorder %s25, 1
    %s27 = scalar_select %p26, 0, %s25
    %s28 = sadd.s32 1, %s19
    %s29 = scalar_select %p26, %s28, %s19
    %p30 = scmp.ge.s32.totalorder %s29, 2
    %s31 = scalar_select %p30, 0, %s29
    %s32 = ssub.s32 %s19, %s31
    %s33 = ssub.s32 %s20, %s27
    %s34 = sor.u32 %s32, %s33
    %p35 = scmp.eq.s32.totalorder %s34, 0
    %s37 = sadd.s32 %s36, 1
    %s38 = scalar_select %p35, %s36, %s37
    %p41 = pneg %p35
    %p42 = scmp.eq.s32.totalorder %s12, 1
    %p43 = por %p41, %p42
    %p44 = scmp.ne.s32.totalorder %s36, %s39
    %p45 = scmp.eq.s32.totalorder %s12, 0
    %p46 = por %p44, %p45
    %p47 = scmp.ne.s32.totalorder %s36, %s39
    %p48 = scmp.eq.s32.totalorder %s17, 1
    %p49 = por %p47, %p48
    %p50 = scmp.ne.s32.totalorder %s39, %s40
    %p51 = scmp.eq.s32.totalorder %s17, 0
    %p52 = por %p50, %p51
    %p53 = scmp.ne.s32.totalorder %s39, %s40
    %p54 = scmp.eq.s32.totalorder %s18, 1
    %p55 = por %p53, %p54
    %p57 = scmp.ne.s32.totalorder %s40, %s56
    %p58 = scmp.eq.s32.totalorder %s18, 0
    %p59 = por %p57, %p58
    %s61 = sadd.s32 %s60, 1
    %p64 = scmp.eq.s32.totalorder %s12, 1
    %p65 = scmp.ne.s32.totalorder %s60, %s62
    %p66 = scmp.eq.s32.totalorder %s12, 0
    %p67 = por %p65, %p66
    %p68 = scmp.ne.s32.totalorder %s60, %s62
    %p69 = scmp.eq.s32.totalorder %s17, 1
    %p70 = por %p68, %p69
    %p71 = scmp.ne.s32.totalorder %s62, %s63
    %p72 = scmp.eq.s32.totalorder %s17, 0
    %p73 = por %p71, %p72
    %p74 = scmp.ne.s32.totalorder %s62, %s63
    %p75 = scmp.eq.s32.totalorder %s18, 1
    %p76 = por %p74, %p75
    %p78 = scmp.ne.s32.totalorder %s63, %s77
    %p79 = scmp.eq.s32.totalorder %s18, 0
    %p80 = por %p78, %p79
    %s82 = sadd.s32 %s81, 1
    %p85 = scmp.eq.s32.totalorder %s12, 1
    %p86 = scmp.ne.s32.totalorder %s81, %s83
    %p87 = scmp.eq.s32.totalorder %s12, 0
    %p88 = por %p86, %p87
    %p89 = scmp.ne.s32.totalorder %s81, %s83
    %p90 = scmp.eq.s32.totalorder %s17, 1
    %p91 = por %p89, %p90
    %p92 = scmp.ne.s32.totalorder %s83, %s84
    %p93 = scmp.eq.s32.totalorder %s17, 0
    %p94 = por %p92, %p93
    %p95 = scmp.ne.s32.totalorder %s83, %s84
    %p96 = scmp.eq.s32.totalorder %s18, 1
    %p97 = por %p95, %p96
    %p99 = scmp.ne.s32.totalorder %s84, %s98
    %p100 = scmp.eq.s32.totalorder %s18, 0
    %p101 = por %p99, %p100
    %s103 = sadd.s32 %s102, 1
    %p106 = scmp.eq.s32.totalorder %s12, 1
    %p107 = scmp.ne.s32.totalorder %s102, %s104
    %p108 = scmp.eq.s32.totalorder %s12, 0
    %p109 = por %p107, %p108
    %p110 = scmp.ne.s32.totalorder %s102, %s104
    %p111 = scmp.eq.s32.totalorder %s17, 1
    %p112 = por %p110, %p111
    %p113 = scmp.ne.s32.totalorder %s104, %s105
    %p114 = scmp.eq.s32.totalorder %s17, 0
    %p115 = por %p113, %p114
    %p116 = scmp.ne.s32.totalorder %s104, %s105
    %p117 = scmp.eq.s32.totalorder %s18, 1
    %p118 = por %p116, %p117
    %p120 = scmp.ne.s32.totalorder %s105, %s119
    %p121 = scmp.eq.s32.totalorder %s18, 0
    %p122 = por %p120, %p121
    %s124 = sadd.s32 %s123, 1
    %p127 = scmp.eq.s32.totalorder %s12, 1
    %p128 = scmp.ne.s32.totalorder %s123, %s125
    %p129 = scmp.eq.s32.totalorder %s12, 0
    %p130 = por %p128, %p129
    %p131 = scmp.ne.s32.totalorder %s123, %s125
    %p132 = scmp.eq.s32.totalorder %s17, 1
    %p133 = por %p131, %p132
    %p134 = scmp.ne.s32.totalorder %s125, %s126
    %p135 = scmp.eq.s32.totalorder %s17, 0
    %p136 = por %p134, %p135
    %p137 = scmp.ne.s32.totalorder %s125, %s126
    %p138 = scmp.eq.s32.totalorder %s18, 1
    %p139 = por %p137, %p138
    %p141 = scmp.ne.s32.totalorder %s126, %s140
    %p142 = scmp.eq.s32.totalorder %s18, 0
    %p143 = por %p141, %p142
    %s144 = ssub.s32 %s19, %s31
    %p145 = scmp.eq.s32.totalorder %s144, 0
    %s147 = sadd.s32 %s146, 1
    %s148 = scalar_select %p145, %s146, %s147
    %p151 = pneg %p145
    %p152 = scmp.eq.s32.totalorder %s12, 1
    %p153 = por %p151, %p152
    %p154 = scmp.ne.s32.totalorder %s146, %s149
    %p155 = scmp.eq.s32.totalorder %s12, 0
    %p156 = por %p154, %p155
    %p157 = scmp.ne.s32.totalorder %s146, %s149
    %p158 = scmp.eq.s32.totalorder %s17, 1
    %p159 = por %p157, %p158
    %p160 = scmp.ne.s32.totalorder %s149, %s150
    %p161 = scmp.eq.s32.totalorder %s17, 0
    %p162 = por %p160, %p161
    %p163 = scmp.ne.s32.totalorder %s149, %s150
    %p164 = scmp.eq.s32.totalorder %s18, 1
    %p165 = por %p163, %p164
    %p167 = scmp.ne.s32.totalorder %s150, %s166
    %p168 = scmp.eq.s32.totalorder %s18, 0
    %p169 = por %p167, %p168
    %p170 = scmp.le.s32.totalorder 1, %s12
    %p171 = scmp.lt.s32.totalorder %s12, 3
    %p172 = pnand %p170, %p171
    %p173 = pneg %p172
    // Predicated region
    $region9: #{_lambda_.3} parent=5 // pred_check
      _
    $region10: #{_lambda_.3} parent=5 // pred_check_branch
      %175 = sbr.rel (%p172) target = $region12
    $region11: #{_lambda_.3} parent=5 // pred_region
      %s176 = ssub.s32 %s12, 1
      // Predicated region
      $region13: #{_lambda_.3} parent=11 // pred_check
        %p177 = pneg %p73
      $region14: #{_lambda_.3} parent=11 // pred_check_branch
        %179 = sbr.rel (%p177) target = $region16
      $region15: #{_lambda_.3} parent=11 // pred_region
        _
      $region16: #{_lambda_.3} parent=11 // pred_fallthru
        _
      // Predicated region
      $region17: #{_lambda_.3} parent=11 // pred_check
        %p180 = pneg %p94
      $region18: #{_lambda_.3} parent=11 // pred_check_branch
        %182 = sbr.rel (%p180) target = $region20
      $region19: #{_lambda_.3} parent=11 // pred_region
        _
      $region20: #{_lambda_.3} parent=11 // pred_fallthru
        _
      // Predicated region
      $region21: #{_lambda_.3} parent=11 // pred_check
        %p183 = pneg %p115
      $region22: #{_lambda_.3} parent=11 // pred_check_branch
        %185 = sbr.rel (%p183) target = $region24
      $region23: #{_lambda_.3} parent=11 // pred_region
        _
      $region24: #{_lambda_.3} parent=11 // pred_fallthru
        _
      // Predicated region
      $region25: #{_lambda_.3} parent=11 // pred_check
        %p186 = pneg %p136
      $region26: #{_lambda_.3} parent=11 // pred_check_branch
        %188 = sbr.rel (%p186) target = $region28
      $region27: #{_lambda_.3} parent=11 // pred_region
        _
      $region28: #{_lambda_.3} parent=11 // pred_fallthru
        _
    $region12: #{_lambda_.3} parent=5 // pred_fallthru
      _
    %p189 = scmp.lt.s32.totalorder %s12, 2
    // Predicated region
    $region29: #{_lambda_.3} parent=5 // pred_check
      %p190 = pneg %p189
    $region30: #{_lambda_.3} parent=5 // pred_check_branch
      %192 = sbr.rel (%p190) target = $region32
    $region31: #{_lambda_.3} parent=5 // pred_region
      // Predicated region
      $region33: #{_lambda_.3} parent=31 // pred_check
        %p193 = pneg %p46
      $region34: #{_lambda_.3} parent=31 // pred_check_branch
        %195 = sbr.rel (%p193) target = $region36
      $region35: #{_lambda_.3} parent=31 // pred_region
        %s196 = smul.u32 8, %s20
        %p197 = scmp.lt.s32.totalorder %s19, 1
        %s198 = scalar_select %p197, %s19, 1
        %p199 = scmp.lt.s32.totalorder %s196, 7
        %s200 = scalar_select %p199, %s196, 7
        %s201 = smul.addr %s198, 8
        %s202 = sadd.s32 %s200, %s201
        %s203 = smul.addr %s202, 4
        %s204 = scalar_lea.vmem %s0, %s203
        %s205 = smul.u32 8, %s20
      $region36: #{_lambda_.3} parent=31 // pred_fallthru
        _
    $region32: #{_lambda_.3} parent=5 // pred_fallthru
      _
    %p206 = scmp.le.s32.totalorder 1, %s12
    %p207 = scmp.lt.s32.totalorder %s12, 3
    %p208 = pnand %p206, %p207
    %p209 = pneg %p208
    // Predicated region
    $region37: #{_lambda_.3} parent=5 // pred_check
      _
    $region38: #{_lambda_.3} parent=5 // pred_check_branch
      %211 = sbr.rel (%p208) target = $region40
    $region39: #{_lambda_.3} parent=5 // pred_region
      %s212 = ssub.s32 %s12, 1
      %s213 = smul.u32 8, %s22
      %p214 = scmp.lt.s32.totalorder %s21, 1
      %s215 = scalar_select %p214, %s21, 1
      %p216 = scmp.lt.s32.totalorder %s213, 7
      %s217 = scalar_select %p216, %s213, 7
      %s218 = smul.addr %s215, 8
      %s219 = sadd.s32 %s217, %s218
      %s220 = smul.addr %s219, 4
      %s221 = scalar_lea.vmem %s0, %s220
      %p222 = pneg %p52
      %p223 = pneg %p49
      %p224 = pneg %p73
      %p225 = pneg %p70
      %p226 = pneg %p94
      %p227 = pneg %p91
      %p228 = pneg %p115
      %p229 = pneg %p112
      %p230 = pneg %p136
      %p231 = pneg %p133
      %p232 = pneg %p162
      %p233 = pneg %p159
      %p234 = scmp.lt.s32.totalorder %s21, 1
      %s235 = scalar_select %p234, %s21, 1
      %s236 = scalar_lea.vmem %s5, %s235
      %s237 = smul.u32 8, %s22
      %p238 = scmp.lt.s32.totalorder %s21, 1
      %s239 = scalar_select %p238, %s21, 1
      %p240 = scmp.lt.s32.totalorder %s237, 7
      %s241 = scalar_select %p240, %s237, 7
      %s242 = smul.addr %s239, 8
      %s243 = sadd.s32 %s241, %s242
      %s244 = smul.addr %s243, 4
      %s245 = scalar_lea.vmem %s0, %s244
      %s246 = smul.u32 8, %s22
      %p247 = scmp.lt.s32.totalorder %s21, 1
      %s248 = scalar_select %p247, %s21, 1
      %s249 = scalar_lea.vmem %s5, %s248
      %p251 = scmp.eq.s32.totalorder %s22, 0
      // Predicated region
      $region41: #{_lambda_.3} parent=39 // pred_check
        %p252 = pneg %p251
      $region42: #{_lambda_.3} parent=39 // pred_check_branch
        %254 = sbr.rel (%p252) target = $region44
      $region43: #{_lambda_.3} parent=39 // pred_region
        %v255 = vlaneseq
        %vm256 = vcmp.ge.s32.totalorder %v255, 0
        %vm257 = vcmp.lt.s32.totalorder %v255, 448
        %vm258 = vmand %vm256, %vm257
        %259 = vst.msk [vmem:[#allocation2] sm:$0xf] %vm258, 0.0
      $region44: #{_lambda_.3} parent=39 // pred_fallthru
        _
      %v260 = vld [vmem:[%s245] sm:$0xf]
      %v261 = vld [vmem:[%s245 + $0x4] sm:$0xf]
      %v262 = vld [vmem:[%s245 + $0x8] sm:$0xf]
      %v263 = vld [vmem:[%s245 + $0xc] sm:$0xf]
      %v264 = vld [vmem:[%s245 + $0x10] sm:$0xf]
      %v265 = vld [vmem:[%s245 + $0x14] sm:$0xf]
      %v266 = vld [vmem:[%s245 + $0x18] sm:$0xf]
      %v267 = vld [vmem:[%s245 + $0x1c] sm:$0xf]
      %v268 = vld [vmem:[%s1] sm:$0xff]
      %v269 = vld [vmem:[%s1 + $0x8] sm:$0xff]
      %v270 = vld [vmem:[%s1 + $0x10] sm:$0xff]
      %v271 = vld [vmem:[%s1 + $0x18] sm:$0xff]
      %v272 = vld [vmem:[%s1 + $0x20] sm:$0xff]
      %v273 = vld [vmem:[%s1 + $0x28] sm:$0xff]
      %v274 = vld [vmem:[%s1 + $0x30] sm:$0xff]
      %v275 = vld [vmem:[%s1 + $0x38] sm:$0xff]
      %v276 = vld [vmem:[%s1 + $0x40] sm:$0xff]
      %v277 = vld [vmem:[%s1 + $0x48] sm:$0xff]
      %v278 = vld [vmem:[%s1 + $0x50] sm:$0xff]
      %v279 = vld [vmem:[%s1 + $0x58] sm:$0xff]
      %v280 = vld [vmem:[%s1 + $0x60] sm:$0xff]
      %v281 = vld [vmem:[%s1 + $0x68] sm:$0xff]
      %v282 = vld [vmem:[%s1 + $0x70] sm:$0xff]
      %v283 = vld [vmem:[%s1 + $0x78] sm:$0xff]
      %v284 = vld [vmem:[%s1 + $0x80] sm:$0xff]
      %v285 = vld [vmem:[%s1 + $0x88] sm:$0xff]
      %v286 = vld [vmem:[%s1 + $0x90] sm:$0xff]
      %v287 = vld [vmem:[%s1 + $0x98] sm:$0xff]
      %v288 = vld [vmem:[%s1 + $0xa0] sm:$0xff]
      %v289 = vld [vmem:[%s1 + $0xa8] sm:$0xff]
      %v290 = vld [vmem:[%s1 + $0xb0] sm:$0xff]
      %v291 = vld [vmem:[%s1 + $0xb8] sm:$0xff]
      %v292 = vld [vmem:[%s1 + $0xc0] sm:$0xff]
      %v293 = vld [vmem:[%s1 + $0xc8] sm:$0xff]
      %v294 = vld [vmem:[%s1 + $0xd0] sm:$0xff]
      %v295 = vld [vmem:[%s1 + $0xd8] sm:$0xff]
      %v296 = vld [vmem:[%s1 + $0xe0] sm:$0xff]
      %v297 = vld [vmem:[%s1 + $0xe8] sm:$0xff]
      %v298 = vld [vmem:[%s1 + $0xf0] sm:$0xff]
      %v299 = vld [vmem:[%s1 + $0xf8] sm:$0xff]
      %v300 = vld [vmem:[%s2] sm:$0xf]
      %v302 = vlaneseq
      %v303 = vshrl.u32 %v302, 7
      %v304 = vsub.s32 0, %v303
      %v305 = vrot.slane %v300, %v304
      %v306 = vlaneseq
      %v307 = vshrl.u32 %v306, 7
      %v308 = vsub.s32 1, %v307
      %v309 = vrot.slane %v300, %v308
      %v310 = vlaneseq
      %v311 = vshrl.u32 %v310, 7
      %v312 = vsub.s32 2, %v311
      %v313 = vrot.slane %v300, %v312
      %v314 = vlaneseq
      %v315 = vshrl.u32 %v314, 7
      %v316 = vsub.s32 3, %v315
      %v317 = vrot.slane %v300, %v316
      %v330 = vunpack.c.l.b16 %v260
      %v331 = vunpack.c.l.b16 %v261
      %v332 = vunpack.c.l.b16 %v262
      %v333 = vunpack.c.l.b16 %v263
      %v334 = vunpack.c.l.b16 %v264
      %v335 = vunpack.c.l.b16 %v265
      %v336 = vunpack.c.l.b16 %v266
      %v337 = vunpack.c.l.b16 %v267
      %v338 = vpack.c.b16 %v331, %v330
      %v339 = vpack.c.b16 %v333, %v332
      %v340 = vpack.c.b16 %v335, %v334
      %v341 = vpack.c.b16 %v337, %v336
      %v378 = vunpack.c.l.b16 %v268
      %v379 = vunpack.c.h.b16 %v268
      %v380 = vunpack.c.l.b16 %v269
      %v381 = vunpack.c.h.b16 %v269
      %v382 = vunpack.c.l.b16 %v270
      %v383 = vunpack.c.h.b16 %v270
      %v384 = vunpack.c.l.b16 %v271
      %v385 = vunpack.c.h.b16 %v271
      %v386 = vunpack.c.l.b16 %v272
      %v387 = vunpack.c.h.b16 %v272
      %v388 = vunpack.c.l.b16 %v273
      %v389 = vunpack.c.h.b16 %v273
      %v390 = vunpack.c.l.b16 %v274
      %v391 = vunpack.c.h.b16 %v274
      %v392 = vunpack.c.l.b16 %v275
      %v393 = vunpack.c.h.b16 %v275
      %v394 = vunpack.c.l.b16 %v276
      %v395 = vunpack.c.h.b16 %v276
      %v396 = vunpack.c.l.b16 %v277
      %v397 = vunpack.c.h.b16 %v277
      %v398 = vunpack.c.l.b16 %v278
      %v399 = vunpack.c.h.b16 %v278
      %v400 = vunpack.c.l.b16 %v279
      %v401 = vunpack.c.h.b16 %v279
      %v402 = vunpack.c.l.b16 %v280
      %v403 = vunpack.c.h.b16 %v280
      %v404 = vunpack.c.l.b16 %v281
      %v405 = vunpack.c.h.b16 %v281
      %v406 = vunpack.c.l.b16 %v282
      %v407 = vunpack.c.h.b16 %v282
      %v408 = vunpack.c.l.b16 %v283
      %v409 = vunpack.c.h.b16 %v283
      %v410 = vunpack.c.l.b16 %v284
      %v411 = vunpack.c.h.b16 %v284
      %v412 = vunpack.c.l.b16 %v285
      %v413 = vunpack.c.h.b16 %v285
      %v414 = vunpack.c.l.b16 %v286
      %v415 = vunpack.c.h.b16 %v286
      %v416 = vunpack.c.l.b16 %v287
      %v417 = vunpack.c.h.b16 %v287
      %v418 = vunpack.c.l.b16 %v288
      %v419 = vunpack.c.h.b16 %v288
      %v420 = vunpack.c.l.b16 %v289
      %v421 = vunpack.c.h.b16 %v289
      %v422 = vunpack.c.l.b16 %v290
      %v423 = vunpack.c.h.b16 %v290
      %v424 = vunpack.c.l.b16 %v291
      %v425 = vunpack.c.h.b16 %v291
      %v426 = vunpack.c.l.b16 %v292
      %v427 = vunpack.c.h.b16 %v292
      %v428 = vunpack.c.l.b16 %v293
      %v429 = vunpack.c.h.b16 %v293
      %v430 = vunpack.c.l.b16 %v294
      %v431 = vunpack.c.h.b16 %v294
      %v432 = vunpack.c.l.b16 %v295
      %v433 = vunpack.c.h.b16 %v295
      %v434 = vunpack.c.l.b16 %v296
      %v435 = vunpack.c.h.b16 %v296
      %v436 = vunpack.c.l.b16 %v297
      %v437 = vunpack.c.h.b16 %v297
      %v438 = vunpack.c.l.b16 %v298
      %v439 = vunpack.c.h.b16 %v298
      %v440 = vunpack.c.l.b16 %v299
      %v441 = vunpack.c.h.b16 %v299
      %v442 = vpack.c.b16 %v382, %v378
      %v443 = vpack.c.b16 %v383, %v379
      %v444 = vpack.c.b16 %v384, %v380
      %v445 = vpack.c.b16 %v385, %v381
      %v446 = vpack.c.b16 %v390, %v386
      %v447 = vpack.c.b16 %v391, %v387
      %v448 = vpack.c.b16 %v392, %v388
      %v449 = vpack.c.b16 %v393, %v389
      %v450 = vpack.c.b16 %v398, %v394
      %v451 = vpack.c.b16 %v399, %v395
      %v452 = vpack.c.b16 %v400, %v396
      %v453 = vpack.c.b16 %v401, %v397
      %v454 = vpack.c.b16 %v406, %v402
      %v455 = vpack.c.b16 %v407, %v403
      %v456 = vpack.c.b16 %v408, %v404
      %v457 = vpack.c.b16 %v409, %v405
      %v458 = vpack.c.b16 %v414, %v410
      %v459 = vpack.c.b16 %v415, %v411
      %v460 = vpack.c.b16 %v416, %v412
      %v461 = vpack.c.b16 %v417, %v413
      %v462 = vpack.c.b16 %v422, %v418
      %v463 = vpack.c.b16 %v423, %v419
      %v464 = vpack.c.b16 %v424, %v420
      %v465 = vpack.c.b16 %v425, %v421
      %v466 = vpack.c.b16 %v430, %v426
      %v467 = vpack.c.b16 %v431, %v427
      %v468 = vpack.c.b16 %v432, %v428
      %v469 = vpack.c.b16 %v433, %v429
      %v470 = vpack.c.b16 %v438, %v434
      %v471 = vpack.c.b16 %v439, %v435
      %v472 = vpack.c.b16 %v440, %v436
      %v473 = vpack.c.b16 %v441, %v437
      %506 = vmatprep.subr.bf16.mxu0 %v443
      %507 = vmatpush1.bf16.msra.mxu0 %v442
      %508 = vmatprep.subr.bf16.mxu0 %v447
      %509 = vmatpush1.bf16.msra.mxu0 %v446
      %510 = vmatprep.subr.bf16.mxu0 %v451
      %511 = vmatpush1.bf16.msra.mxu0 %v450
      %512 = vmatprep.subr.bf16.mxu0 %v455
      %513 = vmatpush1.bf16.msra.mxu0 %v454
      %514 = vmatprep.subr.bf16.mxu0 %v459
      %515 = vmatpush1.bf16.msra.mxu0 %v458
      %516 = vmatprep.subr.bf16.mxu0 %v463
      %517 = vmatpush1.bf16.msra.mxu0 %v462
      %518 = vmatprep.subr.bf16.mxu0 %v467
      %519 = vmatpush1.bf16.msra.mxu0 %v466
      %520 = vmatprep.subr.bf16.mxu0 %v471
      %521 = vmatpush1.bf16.msra.mxu0 %v470
      %522 = vmatprep.subr.bf16.mxu0 0
      %523 = vmatpush1.bf16.msra.mxu0 0
      %524 = vmatprep.subr.bf16.mxu0 0
      %525 = vmatpush1.bf16.msra.mxu0 0
      %526 = vmatprep.subr.bf16.mxu0 0
      %527 = vmatpush1.bf16.msra.mxu0 0
      %528 = vmatprep.subr.bf16.mxu0 0
      %529 = vmatpush1.bf16.msra.mxu0 0
      %530 = vmatprep.subr.bf16.mxu0 0
      %531 = vmatpush1.bf16.msra.mxu0 0
      %532 = vmatprep.subr.bf16.mxu0 0
      %533 = vmatpush1.bf16.msra.mxu0 0
      %534 = vmatprep.subr.bf16.mxu0 0
      %535 = vmatpush1.bf16.msra.mxu0 0
      %536 = vmatprep.subr.bf16.mxu0 0
      %537 = vmatpush1.bf16.msra.mxu0 0
      %538 = vmatprep.mubr.bf16.mxu0 0
      %539 = vmatmul.mubr.bf16.gmra.mrb[0].mxu0 %v338
      %v540 = vpop.f32.mrb[0].mxu0
      %v541 = vadd.f32 %v305, %v540
      %v542 = vpop.f32.mrb[0].mxu0
      %v543 = vadd.f32 %v309, %v542
      %v544 = vpop.f32.mrb[0].mxu0
      %v545 = vadd.f32 %v305, %v544
      %v546 = vpop.f32.mrb[0].mxu0
      %v547 = vadd.f32 %v309, %v546
      %548 = vmatprep.mubr.bf16.mxu0 0
      %549 = vmatmul.mubr.bf16.gmra.mrb[0].mxu0 %v339
      %v550 = vpop.f32.mrb[0].mxu0
      %v551 = vadd.f32 %v305, %v550
      %v552 = vpop.f32.mrb[0].mxu0
      %v553 = vadd.f32 %v309, %v552
      %v554 = vpop.f32.mrb[0].mxu0
      %v555 = vadd.f32 %v305, %v554
      %v556 = vpop.f32.mrb[0].mxu0
      %v557 = vadd.f32 %v309, %v556
      %558 = vmatprep.mubr.bf16.mxu0 0
      %559 = vmatmul.mubr.bf16.gmra.mrb[0].mxu0 %v340
      %v560 = vpop.f32.mrb[0].mxu0
      %v561 = vadd.f32 %v305, %v560
      %v562 = vpop.f32.mrb[0].mxu0
      %v563 = vadd.f32 %v309, %v562
      %v564 = vpop.f32.mrb[0].mxu0
      %v565 = vadd.f32 %v305, %v564
      %v566 = vpop.f32.mrb[0].mxu0
      %v567 = vadd.f32 %v309, %v566
      %568 = vmatprep.mubr.bf16.mxu0 0
      %569 = vmatmul.mubr.bf16.gmra.mrb[0].mxu0 %v341
      %v570 = vpop.f32.mrb[0].mxu0
      %v571 = vadd.f32 %v305, %v570
      %v572 = vpop.f32.mrb[0].mxu0
      %v573 = vadd.f32 %v309, %v572
      %v574 = vpop.f32.mrb[0].mxu0
      %v575 = vadd.f32 %v305, %v574
      %v576 = vpop.f32.mrb[0].mxu0
      %v577 = vadd.f32 %v309, %v576
      %578 = vdwg.mxu0
      %579 = vmatprep.subr.bf16.mxu0 %v445
      %580 = vmatpush1.bf16.msra.mxu0 %v444
      %581 = vmatprep.subr.bf16.mxu0 %v449
      %582 = vmatpush1.bf16.msra.mxu0 %v448
      %583 = vmatprep.subr.bf16.mxu0 %v453
      %584 = vmatpush1.bf16.msra.mxu0 %v452
      %585 = vmatprep.subr.bf16.mxu0 %v457
      %586 = vmatpush1.bf16.msra.mxu0 %v456
      %587 = vmatprep.subr.bf16.mxu0 %v461
      %588 = vmatpush1.bf16.msra.mxu0 %v460
      %589 = vmatprep.subr.bf16.mxu0 %v465
      %590 = vmatpush1.bf16.msra.mxu0 %v464
      %591 = vmatprep.subr.bf16.mxu0 %v469
      %592 = vmatpush1.bf16.msra.mxu0 %v468
      %593 = vmatprep.subr.bf16.mxu0 %v473
      %594 = vmatpush1.bf16.msra.mxu0 %v472
      %595 = vmatprep.subr.bf16.mxu0 0
      %596 = vmatpush1.bf16.msra.mxu0 0
      %597 = vmatprep.subr.bf16.mxu0 0
      %598 = vmatpush1.bf16.msra.mxu0 0
      %599 = vmatprep.subr.bf16.mxu0 0
      %600 = vmatpush1.bf16.msra.mxu0 0
      %601 = vmatprep.subr.bf16.mxu0 0
      %602 = vmatpush1.bf16.msra.mxu0 0
      %603 = vmatprep.subr.bf16.mxu0 0
      %604 = vmatpush1.bf16.msra.mxu0 0
      %605 = vmatprep.subr.bf16.mxu0 0
      %606 = vmatpush1.bf16.msra.mxu0 0
      %607 = vmatprep.subr.bf16.mxu0 0
      %608 = vmatpush1.bf16.msra.mxu0 0
      %609 = vmatprep.subr.bf16.mxu0 0
      %610 = vmatpush1.bf16.msra.mxu0 0
      %611 = vmatprep.mubr.bf16.mxu0 0
      %612 = vmatmul.mubr.bf16.gmra.mrb[0].mxu0 %v338
      %v613 = vpop.f32.mrb[0].mxu0
      %v614 = vadd.f32 %v313, %v613
      %v615 = vpop.f32.mrb[0].mxu0
      %v616 = vadd.f32 %v317, %v615
      %v617 = vpop.f32.mrb[0].mxu0
      %v618 = vadd.f32 %v313, %v617
      %v619 = vpop.f32.mrb[0].mxu0
      %v620 = vadd.f32 %v317, %v619
      %621 = vmatprep.mubr.bf16.mxu0 0
      %622 = vmatmul.mubr.bf16.gmra.mrb[0].mxu0 %v339
      %v623 = vpop.f32.mrb[0].mxu0
      %v624 = vadd.f32 %v313, %v623
      %v625 = vpop.f32.mrb[0].mxu0
      %v626 = vadd.f32 %v317, %v625
      %v627 = vpop.f32.mrb[0].mxu0
      %v628 = vadd.f32 %v313, %v627
      %v629 = vpop.f32.mrb[0].mxu0
      %v630 = vadd.f32 %v317, %v629
      %631 = vmatprep.mubr.bf16.mxu0 0
      %632 = vmatmul.mubr.bf16.gmra.mrb[0].mxu0 %v340
      %v633 = vpop.f32.mrb[0].mxu0
      %v634 = vadd.f32 %v313, %v633
      %v635 = vpop.f32.mrb[0].mxu0
      %v636 = vadd.f32 %v317, %v635
      %v637 = vpop.f32.mrb[0].mxu0
      %v638 = vadd.f32 %v313, %v637
      %v639 = vpop.f32.mrb[0].mxu0
      %v640 = vadd.f32 %v317, %v639
      %641 = vmatprep.mubr.bf16.mxu0 0
      %642 = vmatmul.mubr.bf16.gmra.mrb[0].mxu0 %v341
      %v643 = vpop.f32.mrb[0].mxu0
      %v644 = vadd.f32 %v313, %v643
      %v645 = vpop.f32.mrb[0].mxu0
      %v646 = vadd.f32 %v317, %v645
      %v647 = vpop.f32.mrb[0].mxu0
      %v648 = vadd.f32 %v313, %v647
      %v649 = vpop.f32.mrb[0].mxu0
      %v650 = vadd.f32 %v317, %v649
      %651 = vdwg.mxu0
      %v652 = vxor.u32 %v541, 2147483648
      %v653 = vxor.u32 %v543, 2147483648
      %v654 = vxor.u32 %v614, 2147483648
      %v655 = vxor.u32 %v616, 2147483648
      %v656 = vxor.u32 %v545, 2147483648
      %v657 = vxor.u32 %v547, 2147483648
      %v658 = vxor.u32 %v618, 2147483648
      %v659 = vxor.u32 %v620, 2147483648
      %v660 = vxor.u32 %v551, 2147483648
      %v661 = vxor.u32 %v553, 2147483648
      %v662 = vxor.u32 %v624, 2147483648
      %v663 = vxor.u32 %v626, 2147483648
      %v664 = vxor.u32 %v555, 2147483648
      %v665 = vxor.u32 %v557, 2147483648
      %v666 = vxor.u32 %v628, 2147483648
      %v667 = vxor.u32 %v630, 2147483648
      %v668 = vxor.u32 %v561, 2147483648
      %v669 = vxor.u32 %v563, 2147483648
      %v670 = vxor.u32 %v634, 2147483648
      %v671 = vxor.u32 %v636, 2147483648
      %v672 = vxor.u32 %v565, 2147483648
      %v673 = vxor.u32 %v567, 2147483648
      %v674 = vxor.u32 %v638, 2147483648
      %v675 = vxor.u32 %v640, 2147483648
      %v676 = vxor.u32 %v571, 2147483648
      %v677 = vxor.u32 %v573, 2147483648
      %v678 = vxor.u32 %v644, 2147483648
      %v679 = vxor.u32 %v646, 2147483648
      %v680 = vxor.u32 %v575, 2147483648
      %v681 = vxor.u32 %v577, 2147483648
      %v682 = vxor.u32 %v648, 2147483648
      %v683 = vxor.u32 %v650, 2147483648
      %v684 = vmul.f32 %v652, 1.442695
      %v685 = vpow.pop %v684
      %v686 = vmul.f32 %v653, 1.442695
      %v687 = vpow.pop %v686
      %v688 = vmul.f32 %v654, 1.442695
      %v689 = vpow.pop %v688
      %v690 = vmul.f32 %v655, 1.442695
      %v691 = vpow.pop %v690
      %v692 = vmul.f32 %v656, 1.442695
      %v693 = vpow.pop %v692
      %v694 = vmul.f32 %v657, 1.442695
      %v695 = vpow.pop %v694
      %v696 = vmul.f32 %v658, 1.442695
      %v697 = vpow.pop %v696
      %v698 = vmul.f32 %v659, 1.442695
      %v699 = vpow.pop %v698
      %v700 = vmul.f32 %v660, 1.442695
      %v701 = vpow.pop %v700
      %v702 = vmul.f32 %v661, 1.442695
      %v703 = vpow.pop %v702
      %v704 = vmul.f32 %v662, 1.442695
      %v705 = vpow.pop %v704
      %v706 = vmul.f32 %v663, 1.442695
      %v707 = vpow.pop %v706
      %v708 = vmul.f32 %v664, 1.442695
      %v709 = vpow.pop %v708
      %v710 = vmul.f32 %v665, 1.442695
      %v711 = vpow.pop %v710
      %v712 = vmul.f32 %v666, 1.442695
      %v713 = vpow.pop %v712
      %v714 = vmul.f32 %v667, 1.442695
      %v715 = vpow.pop %v714
      %v716 = vmul.f32 %v668, 1.442695
      %v717 = vpow.pop %v716
      %v718 = vmul.f32 %v669, 1.442695
      %v719 = vpow.pop %v718
      %v720 = vmul.f32 %v670, 1.442695
      %v721 = vpow.pop %v720
      %v722 = vmul.f32 %v671, 1.442695
      %v723 = vpow.pop %v722
      %v724 = vmul.f32 %v672, 1.442695
      %v725 = vpow.pop %v724
      %v726 = vmul.f32 %v673, 1.442695
      %v727 = vpow.pop %v726
      %v728 = vmul.f32 %v674, 1.442695
      %v729 = vpow.pop %v728
      %v730 = vmul.f32 %v675, 1.442695
      %v731 = vpow.pop %v730
      %v732 = vmul.f32 %v676, 1.442695
      %v733 = vpow.pop %v732
      %v734 = vmul.f32 %v677, 1.442695
      %v735 = vpow.pop %v734
      %v736 = vmul.f32 %v678, 1.442695
      %v737 = vpow.pop %v736
      %v738 = vmul.f32 %v679, 1.442695
      %v739 = vpow.pop %v738
      %v740 = vmul.f32 %v680, 1.442695
      %v741 = vpow.pop %v740
      %v742 = vmul.f32 %v681, 1.442695
      %v743 = vpow.pop %v742
      %v744 = vmul.f32 %v682, 1.442695
      %v745 = vpow.pop %v744
      %v746 = vmul.f32 %v683, 1.442695
      %v747 = vpow.pop %v746
      %v748 = vadd.f32 %v685, 1.0
      %v749 = vadd.f32 %v687, 1.0
      %v750 = vadd.f32 %v689, 1.0
      %v751 = vadd.f32 %v691, 1.0
      %v752 = vadd.f32 %v693, 1.0
      %v753 = vadd.f32 %v695, 1.0
      %v754 = vadd.f32 %v697, 1.0
      %v755 = vadd.f32 %v699, 1.0
      %v756 = vadd.f32 %v701, 1.0
      %v757 = vadd.f32 %v703, 1.0
      %v758 = vadd.f32 %v705, 1.0
      %v759 = vadd.f32 %v707, 1.0
      %v760 = vadd.f32 %v709, 1.0
      %v761 = vadd.f32 %v711, 1.0
      %v762 = vadd.f32 %v713, 1.0
      %v763 = vadd.f32 %v715, 1.0
      %v764 = vadd.f32 %v717, 1.0
      %v765 = vadd.f32 %v719, 1.0
      %v766 = vadd.f32 %v721, 1.0
      %v767 = vadd.f32 %v723, 1.0
      %v768 = vadd.f32 %v725, 1.0
      %v769 = vadd.f32 %v727, 1.0
      %v770 = vadd.f32 %v729, 1.0
      %v771 = vadd.f32 %v731, 1.0
      %v772 = vadd.f32 %v733, 1.0
      %v773 = vadd.f32 %v735, 1.0
      %v774 = vadd.f32 %v737, 1.0
      %v775 = vadd.f32 %v739, 1.0
      %v776 = vadd.f32 %v741, 1.0
      %v777 = vadd.f32 %v743, 1.0
      %v778 = vadd.f32 %v745, 1.0
      %v779 = vadd.f32 %v747, 1.0
      %v780 = vrcp.pop %v748
      %v781 = vmul.f32 1.0, %v780
      %v782 = vrcp.pop %v749
      %v783 = vmul.f32 1.0, %v782
      %v784 = vrcp.pop %v750
      %v785 = vmul.f32 1.0, %v784
      %v786 = vrcp.pop %v751
      %v787 = vmul.f32 1.0, %v786
      %v788 = vrcp.pop %v752
      %v789 = vmul.f32 1.0, %v788
      %v790 = vrcp.pop %v753
      %v791 = vmul.f32 1.0, %v790
      %v792 = vrcp.pop %v754
      %v793 = vmul.f32 1.0, %v792
      %v794 = vrcp.pop %v755
      %v795 = vmul.f32 1.0, %v794
      %v796 = vrcp.pop %v756
      %v797 = vmul.f32 1.0, %v796
      %v798 = vrcp.pop %v757
      %v799 = vmul.f32 1.0, %v798
      %v800 = vrcp.pop %v758
      %v801 = vmul.f32 1.0, %v800
      %v802 = vrcp.pop %v759
      %v803 = vmul.f32 1.0, %v802
      %v804 = vrcp.pop %v760
      %v805 = vmul.f32 1.0, %v804
      %v806 = vrcp.pop %v761
      %v807 = vmul.f32 1.0, %v806
      %v808 = vrcp.pop %v762
      %v809 = vmul.f32 1.0, %v808
      %v810 = vrcp.pop %v763
      %v811 = vmul.f32 1.0, %v810
      %v812 = vrcp.pop %v764
      %v813 = vmul.f32 1.0, %v812
      %v814 = vrcp.pop %v765
      %v815 = vmul.f32 1.0, %v814
      %v816 = vrcp.pop %v766
      %v817 = vmul.f32 1.0, %v816
      %v818 = vrcp.pop %v767
      %v819 = vmul.f32 1.0, %v818
      %v820 = vrcp.pop %v768
      %v821 = vmul.f32 1.0, %v820
      %v822 = vrcp.pop %v769
      %v823 = vmul.f32 1.0, %v822
      %v824 = vrcp.pop %v770
      %v825 = vmul.f32 1.0, %v824
      %v826 = vrcp.pop %v771
      %v827 = vmul.f32 1.0, %v826
      %v828 = vrcp.pop %v772
      %v829 = vmul.f32 1.0, %v828
      %v830 = vrcp.pop %v773
      %v831 = vmul.f32 1.0, %v830
      %v832 = vrcp.pop %v774
      %v833 = vmul.f32 1.0, %v832
      %v834 = vrcp.pop %v775
      %v835 = vmul.f32 1.0, %v834
      %v836 = vrcp.pop %v776
      %v837 = vmul.f32 1.0, %v836
      %v838 = vrcp.pop %v777
      %v839 = vmul.f32 1.0, %v838
      %v840 = vrcp.pop %v778
      %v841 = vmul.f32 1.0, %v840
      %v842 = vrcp.pop %v779
      %v843 = vmul.f32 1.0, %v842
      %v844 = vmul.f32 %v541, %v781
      %v845 = vmul.f32 %v543, %v783
      %v846 = vmul.f32 %v614, %v785
      %v847 = vmul.f32 %v616, %v787
      %v848 = vmul.f32 %v545, %v789
      %v849 = vmul.f32 %v547, %v791
      %v850 = vmul.f32 %v618, %v793
      %v851 = vmul.f32 %v620, %v795
      %v852 = vmul.f32 %v551, %v797
      %v853 = vmul.f32 %v553, %v799
      %v854 = vmul.f32 %v624, %v801
      %v855 = vmul.f32 %v626, %v803
      %v856 = vmul.f32 %v555, %v805
      %v857 = vmul.f32 %v557, %v807
      %v858 = vmul.f32 %v628, %v809
      %v859 = vmul.f32 %v630, %v811
      %v860 = vmul.f32 %v561, %v813
      %v861 = vmul.f32 %v563, %v815
      %v862 = vmul.f32 %v634, %v817
      %v863 = vmul.f32 %v636, %v819
      %v864 = vmul.f32 %v565, %v821
      %v865 = vmul.f32 %v567, %v823
      %v866 = vmul.f32 %v638, %v825
      %v867 = vmul.f32 %v640, %v827
      %v868 = vmul.f32 %v571, %v829
      %v869 = vmul.f32 %v573, %v831
      %v870 = vmul.f32 %v644, %v833
      %v871 = vmul.f32 %v646, %v835
      %v872 = vmul.f32 %v575, %v837
      %v873 = vmul.f32 %v577, %v839
      %v874 = vmul.f32 %v648, %v841
      %v875 = vmul.f32 %v650, %v843
      %v876 = vld [vmem:[#allocation2] sm:$0xf]
      %v877 = vadd.f32 %v844, %v848
      %v878 = vadd.f32 %v877, %v852
      %v879 = vadd.f32 %v878, %v856
      %v880 = vadd.f32 %v879, %v860
      %v881 = vadd.f32 %v880, %v864
      %v882 = vadd.f32 %v881, %v868
      %v883 = vadd.f32 %v882, %v872
      %v884 = vrot.slane %v883, 4
      %v885 = vadd.f32 %v883, %v884
      %v886 = vrot.slane %v885, 2
      %v887 = vadd.f32 %v885, %v886
      %v888 = vrot.slane %v887, 1
      %v889 = vadd.f32 %v887, %v888
      %v890 = vadd.f32 %v845, %v849
      %v891 = vadd.f32 %v890, %v853
      %v892 = vadd.f32 %v891, %v857
      %v893 = vadd.f32 %v892, %v861
      %v894 = vadd.f32 %v893, %v865
      %v895 = vadd.f32 %v894, %v869
      %v896 = vadd.f32 %v895, %v873
      %v897 = vrot.slane %v896, 4
      %v898 = vadd.f32 %v896, %v897
      %v899 = vrot.slane %v898, 2
      %v900 = vadd.f32 %v898, %v899
      %v901 = vrot.slane %v900, 1
      %v902 = vadd.f32 %v900, %v901
      %v903 = vadd.f32 %v846, %v850
      %v904 = vadd.f32 %v903, %v854
      %v905 = vadd.f32 %v904, %v858
      %v906 = vadd.f32 %v905, %v862
      %v907 = vadd.f32 %v906, %v866
      %v908 = vadd.f32 %v907, %v870
      %v909 = vadd.f32 %v908, %v874
      %v910 = vrot.slane %v909, 4
      %v911 = vadd.f32 %v909, %v910
      %v912 = vrot.slane %v911, 2
      %v913 = vadd.f32 %v911, %v912
      %v914 = vrot.slane %v913, 1
      %v915 = vadd.f32 %v913, %v914
      %vm916 = vcmask 523264
      %v917 = vsel %vm916, %v847, 0.0
      %v918 = vsel %vm916, %v851, 0.0
      %v919 = vadd.f32 %v917, %v918
      %v920 = vsel %vm916, %v855, 0.0
      %v921 = vadd.f32 %v919, %v920
      %v922 = vsel %vm916, %v859, 0.0
      %v923 = vadd.f32 %v921, %v922
      %v924 = vsel %vm916, %v863, 0.0
      %v925 = vadd.f32 %v923, %v924
      %v926 = vsel %vm916, %v867, 0.0
      %v927 = vadd.f32 %v925, %v926
      %v928 = vsel %vm916, %v871, 0.0
      %v929 = vadd.f32 %v927, %v928
      %v930 = vsel %vm916, %v875, 0.0
      %v931 = vadd.f32 %v929, %v930
      %v932 = vrot.slane %v931, 4
      %v933 = vadd.f32 %v931, %v932
      %v934 = vrot.slane %v933, 2
      %v935 = vadd.f32 %v933, %v934
      %v936 = vrot.slane %v935, 1
      %v937 = vadd.f32 %v935, %v936
      %v942 = vcombine.low %v889, %v902
      %v943 = vcombine.low %v915, %v937
      %v945 = vunpack.c.l.s4 1966171168
      %v946 = vunpack.c.0.s8 %v945
      %v947 = vlaneseq
      %v948 = vshrl.u32 %v947, 7
      %v949 = vsub.s32 %v946, %v948
      %v950 = vrot.slane %v942, %v949
      %v952 = vunpack.c.l.s4 1966171168
      %v953 = vunpack.c.0.s8 %v952
      %v954 = vlaneseq
      %v955 = vshrl.u32 %v954, 7
      %v956 = vsub.s32 %v953, %v955
      %v957 = vrot.slane %v943, %v956
      %v958 = vcombine.low %v950, %v957
      %v960 = vunpack.c.l.s4 1966171168
      %v961 = vunpack.c.0.s8 %v960
      %v962 = vlaneseq
      %v963 = vshrl.u32 %v962, 7
      %v964 = vsub.s32 %v961, %v963
      %v965 = vrot.slane %v958, %v964
      %v967 = vadd.f32 %v876, %v965
      %v968 = vlaneseq
      %vm969 = vcmp.ge.s32.totalorder %v968, 0
      %vm970 = vcmp.lt.s32.totalorder %v968, 448
      %vm971 = vmand %vm969, %vm970
      %972 = vst.msk [vmem:[#allocation2] sm:$0xf] %vm971, %v967
      // Predicated region
      $region45: #{_lambda_.3} parent=39 // pred_check
        %p973 = pneg %p251
      $region46: #{_lambda_.3} parent=39 // pred_check_branch
        %975 = sbr.rel (%p973) target = $region48
      $region47: #{_lambda_.3} parent=39 // pred_region
        %v976 = vld [vmem:[#allocation2] sm:$0xf]
        %v977 = vmul.f32 %v976, 0.015625
        %v978 = vld [vmem:[%s3] sm:$0xf]
        %v979 = vmul.f32 %v977, %v978
        %v981 = vlaneseq
        %v982 = vshrl.u32 %v981, 7
        %v983 = vsub.s32 0, %v982
        %v984 = vrot.slane %v979, %v983
        %v985 = vlaneseq
        %v986 = vshrl.u32 %v985, 7
        %v987 = vsub.s32 1, %v986
        %v988 = vrot.slane %v979, %v987
        %v989 = vlaneseq
        %v990 = vshrl.u32 %v989, 7
        %v991 = vsub.s32 2, %v990
        %v992 = vrot.slane %v979, %v991
        %v993 = vlaneseq
        %v994 = vshrl.u32 %v993, 7
        %v995 = vsub.s32 3, %v994
        %v996 = vrot.slane %v979, %v995
        %vm1001 = vcmask 1040384
        %v1002 = vsel %vm1001, %v984, 0.0
        %v1003 = vsel %vm1001, %v988, 0.0
        %v1004 = vadd.f32 %v1002, %v1003
        %v1005 = vsel %vm1001, %v992, 0.0
        %v1006 = vadd.f32 %v1004, %v1005
        %vm1007 = vcmask 516096
        %v1008 = vsel %vm1007, %v996, 0.0
        %v1009 = vadd.f32 %v1006, %v1008
        %1010 = vadd.xlane.f32.xlu0 %v1009
        %v1011 = vpop.xlane.xlu0 %1010
        %s1012 = sld [smem:[#allocation3]]
        %v1013 = vstv %s1012
        %v1014 = vadd.f32 %v1011, %v1013
        %1015 = vst [vmem:[%s249] sm:$0x1] %v1014
      $region48: #{_lambda_.3} parent=39 // pred_fallthru
        _
      %p1016 = scmp.lt.s32.totalorder %s21, 1
      %s1017 = scalar_select %p1016, %s21, 1
      %s1018 = scalar_lea.vmem %s5, %s1017
      // Predicated region
      $region49: #{_lambda_.3} parent=39 // pred_check
        %p1019 = pneg %p159
      $region50: #{_lambda_.3} parent=39 // pred_check_branch
        %1021 = sbr.rel (%p1019) target = $region52
      $region51: #{_lambda_.3} parent=39 // pred_region
        _
      $region52: #{_lambda_.3} parent=39 // pred_fallthru
        _
    $region40: #{_lambda_.3} parent=5 // pred_fallthru
      _
    %p1022 = scmp.le.s32.totalorder 2, %s12
    // Predicated region
    $region53: #{_lambda_.3} parent=5 // pred_check
      %p1023 = pneg %p1022
    $region54: #{_lambda_.3} parent=5 // pred_check_branch
      %1025 = sbr.rel (%p1023) target = $region56
    $region55: #{_lambda_.3} parent=5 // pred_region
      %s1026 = ssub.s32 %s12, 2
      // Predicated region
      $region57: #{_lambda_.3} parent=55 // pred_check
        %p1027 = pneg %p165
      $region58: #{_lambda_.3} parent=55 // pred_check_branch
        %1029 = sbr.rel (%p1027) target = $region60
      $region59: #{_lambda_.3} parent=55 // pred_region
        %p1030 = scmp.lt.s32.totalorder %s23, 1
        %s1031 = scalar_select %p1030, %s23, 1
        %s1032 = scalar_lea.vmem %s5, %s1031
      $region60: #{_lambda_.3} parent=55 // pred_fallthru
        _
    $region56: #{_lambda_.3} parent=5 // pred_fallthru
      _
  $region6: #{_lambda_.3} parent=0 // loop_footer
    %s16 = sadd.s32 1, %s12
  $region7: #{_lambda_.3} parent=0 // loop_footer_branch
    %11 = sbr.rel target = $region3
  $region8: #{_lambda_.3} parent=0 // loop_exit
    _

</llo_original>
